<compile_context>
chip_gen: v7x
topology: tpu7x:2x2x1
jax: 0.10.0
libtpu: 0.0.40
codegen_flags: <defaults>
</compile_context>

<pallas_src>
import functools

import jax
import jax.numpy as jnp
from jax.experimental import pallas as pl
from jax.experimental.pallas import tpu as pltpu


# ----------------------------------------------------------------------------
# Helpers
# ----------------------------------------------------------------------------
@functools.lru_cache(maxsize=None)
def _vmem_limit_bytes():
    """~3/4 of physical VMEM, capped at 100 MiB (fits v5e/v6e 128 MiB and v7x 64 MiB)."""
    try:
        cap = int(pltpu.get_tpu_info().vmem_capacity_bytes)
    except Exception:
        cap = 64 * 1024 * 1024
    return int(min(cap * 3 // 4, 100 * 1024 * 1024))


def _const_spec(shape, grid_ndim):
    """BlockSpec for a grid-constant operand (weights / biases / LN params).

    Single-buffered: the second pipeline buffer of a never-changing block is pure
    VMEM waste (feedback item).  Falls back to the default spec if this Pallas
    version does not accept pipeline_mode.
    """
    zeros = (0,) * len(shape)
    if grid_ndim == 1:
        imap = lambda i: zeros
    else:
        imap = lambda bi, qi: zeros
    try:
        return pl.BlockSpec(shape, imap, pipeline_mode=pl.Buffered(1))
    except TypeError:  # older BlockSpec signature
        return pl.BlockSpec(shape, imap)


# ----------------------------------------------------------------------------
# Fused attention block kernel:
#   QKV proj -> multi-head attention (+ optional additive mask) -> out proj -> add & LN
# ----------------------------------------------------------------------------
def _attn_block_kernel(*refs, num_heads, scale, eps, has_mask, mask_per_batch,
                       role_index, n_act):
    act_refs = refs[:n_act]
    rest = refs[n_act:]
    if has_mask:
        mask_ref, rest = rest[0], rest[1:]
    else:
        mask_ref = None
    (wqkv_ref, bqkv_ref, wo_ref, bo_ref,
     gamma_ref, beta_ref, o_ref, ctx_ref) = rest

    xq_ref = act_refs[role_index[0]]
    xk_ref = act_refs[role_index[1]]
    xv_ref = act_refs[role_index[2]]
    res_ref = act_refs[role_index[3]]

    e = o_ref.shape[-1]
    dh = e // num_heads
    cd = jnp.bfloat16  # MXU operand dtype; accumulation stays f32

    # QKV projections (bf16 operands, f32 accumulation + f32 bias).
    xq = xq_ref[0].astype(cd)
    xk = xk_ref[0].astype(cd)
    xv = xv_ref[0].astype(cd)
    q = jnp.dot(xq, wqkv_ref[0], preferred_element_type=jnp.float32) + bqkv_ref[0]
    k = jnp.dot(xk, wqkv_ref[1], preferred_element_type=jnp.float32) + bqkv_ref[1]
    v = jnp.dot(xv, wqkv_ref[2], preferred_element_type=jnp.float32) + bqkv_ref[2]

    # Fold the softmax scale into Q once (one (tq,E) multiply instead of per-head
    # (tq,Sk) multiplies), then cast attention operands to bf16.
    q = (q * scale).astype(cd)
    k = k.astype(cd)
    v = v.astype(cd)

    if has_mask:
        m = mask_ref[0] if mask_per_batch else mask_ref[...]

    # Per-head attention; each head's context is written directly into its column
    # slice of the f32 VMEM scratch (no lane-dim concatenate, no ctx pileup).
    for h in range(num_heads):
        sl = slice(h * dh, (h + 1) * dh)
        # q @ k^T without an explicit transpose: contract the last dims.
        s = jax.lax.dot_general(q[:, sl], k[:, sl], (((1,), (1,)), ((), ())),
                                preferred_element_type=jnp.float32)
        if has_mask:
            s = s + m
        s = s - jnp.max(s, axis=-1, keepdims=True)
        p = jnp.exp(s)
        p = p / jnp.sum(p, axis=-1, keepdims=True)   # exact softmax (torch parity)
        ctx_ref[:, sl] = jnp.dot(p.astype(cd), v[:, sl],
                                 preferred_element_type=jnp.float32)

    # Output projection + fused add & LayerNorm epilogue (single lane-dense store).
    out = jnp.dot(ctx_ref[...].astype(cd), wo_ref[...],
                  preferred_element_type=jnp.float32) + bo_ref[...]
    y = res_ref[0].astype(jnp.float32) + out
    mu = jnp.mean(y, axis=-1, keepdims=True)
    var = jnp.mean((y - mu) * (y - mu), axis=-1, keepdims=True)
    yn = (y - mu) * jax.lax.rsqrt(var + eps)
    o_ref[0] = (yn * gamma_ref[...] + beta_ref[...]).astype(o_ref.dtype)


def attention_block(xq, xk, xv, residual, attn_p, norm_p, num_heads,
                    mask=None, eps=1e-5):
    """y = LayerNorm(residual + MHA(xq, xk, xv[, mask])); one fused pallas_call."""
    b, sq, e = xq.shape
    sk = xk.shape[1]
    if e % num_heads != 0:
        raise ValueError("embed_dim must be divisible by num_heads")
    dh = e // num_heads
    scale = dh ** -0.5

    # Query-row tiling: bounds per-step VMEM independent of Sq and gives the grid
    # enough parallel steps; K/V stay resident across the query-tile axis.
    tq = sq
    for cand in (256, 128, 64, 32, 16, 8):
        if cand <= sq and sq % cand == 0:
            tq = cand
            break
    n_qt = sq // tq

    # --- activation operands, deduplicated when array identity + block layout match
    #     (self-attention: q==k and v==residual -> 2 DMA streams instead of 4) ----
    def role_layout(role):
        if role in ("q", "r"):
            shp = (1, tq, e)
            imap = lambda bi, qi: (bi, qi, 0)
            key = ("qt", tq) if n_qt > 1 else ("blk", sq)
        else:
            shp = (1, sk, e)
            imap = lambda bi, qi: (bi, 0, 0)
            key = ("kv", sk) if n_qt > 1 else ("blk", sk)
        return shp, imap, key

    uniq_arrays, uniq_specs, role_index, seen = [], [], [], {}
    for role, arr in (("q", xq), ("k", xk), ("v", xv), ("r", residual)):
        shp, imap, key = role_layout(role)
        full_key = (id(arr), key)
        if full_key not in seen:
            seen[full_key] = len(uniq_arrays)
            uniq_arrays.append(arr)
            uniq_specs.append(pl.BlockSpec(shp, imap))
        role_index.append(seen[full_key])
    n_act = len(uniq_arrays)

    # --- optional additive mask (None => nothing is DMA'd / added) ---------------
    has_mask = mask is not None
    mask_per_batch = False
    mask_inputs, mask_specs = [], []
    if has_mask:
        m = mask.astype(jnp.float32)
        if m.ndim == 3 and m.shape[0] == 1:
            m = m[0]                       # keep it 2-D: DMA'd once, stays resident
        if m.ndim == 2:
            mask_specs.append(pl.BlockSpec((tq, sk), lambda bi, qi: (qi, 0)))
        elif m.ndim == 3 and m.shape[0] == b:
            mask_per_batch = True
            mask_specs.append(pl.BlockSpec((1, tq, sk), lambda bi, qi: (bi, qi, 0)))
        else:
            raise ValueError("mask must have shape (Sq,Sk), (1,Sq,Sk) or (B,Sq,Sk)")
        mask_inputs.append(m)

    # --- weights: bf16 matmul operands, f32 biases / LN params, single-buffered --
    wqkv = attn_p["wqkv"].astype(jnp.bfloat16)                 # (3, E, E)
    bqkv = attn_p["bqkv"].reshape(3, 1, e).astype(jnp.float32)  # (3, 1, E)
    wo = attn_p["wo"].astype(jnp.bfloat16)                     # (E, E)
    bo = attn_p["bo"].reshape(1, e).astype(jnp.float32)
    gamma = norm_p["g"].reshape(1, e).astype(jnp.float32)
    beta = norm_p["b"].reshape(1, e).astype(jnp.float32)

    weight_inputs = [wqkv, bqkv, wo, bo, gamma, beta]
    weight_specs = [
        _const_spec((3, e, e), 2),
        _const_spec((3, 1, e), 2),
        _const_spec((e, e), 2),
        _const_spec((1, e), 2),
        _const_spec((1, e), 2),
        _const_spec((1, e), 2),
    ]

    kernel = functools.partial(
        _attn_block_kernel, num_heads=num_heads, scale=scale, eps=eps,
        has_mask=has_mask, mask_per_batch=mask_per_batch,
        role_index=tuple(role_index), n_act=n_act)

    return pl.pallas_call(
        kernel,
        out_shape=jax.ShapeDtypeStruct((b, sq, e), xq.dtype),
        grid=(b, n_qt),
        in_specs=uniq_specs + mask_specs + weight_specs,
        out_specs=pl.BlockSpec((1, tq, e), lambda bi, qi: (bi, qi, 0)),
        scratch_shapes=(pltpu.VMEM((tq, e), jnp.float32),),   # per-tile context
        compiler_params=pltpu.CompilerParams(
            dimension_semantics=("parallel", "parallel"),
            vmem_limit_bytes=_vmem_limit_bytes()),
    )(*uniq_arrays, *mask_inputs, *weight_inputs)


# ----------------------------------------------------------------------------
# Fused FFN block kernel: fc1 + GELU -> fc2 -> add & LN, tiled over rows
# ----------------------------------------------------------------------------
def _ffn_block_kernel(x_ref, w1_ref, b1_ref, w2_ref, b2_ref,
                      gamma_ref, beta_ref, o_ref, *, eps):
    cd = jnp.bfloat16
    x = x_ref[...]
    h = jnp.dot(x.astype(cd), w1_ref[...],
                preferred_element_type=jnp.float32) + b1_ref[...]
    h = jax.nn.gelu(h, approximate=False)        # matches torch.nn.GELU default (erf)
    y = jnp.dot(h.astype(cd), w2_ref[...],
                preferred_element_type=jnp.float32) + b2_ref[...]
    y = x.astype(jnp.float32) + y                # residual is the FFN input itself
    mu = jnp.mean(y, axis=-1, keepdims=True)
    var = jnp.mean((y - mu) * (y - mu), axis=-1, keepdims=True)
    yn = (y - mu) * jax.lax.rsqrt(var + eps)
    o_ref[...] = (yn * gamma_ref[...] + beta_ref[...]).astype(o_ref.dtype)


def ffn_block(x, ffn_p, norm_p, eps=1e-5):
    """y = LayerNorm(x + MLP(x)); one pallas_call, grid over padded row tiles."""
    n, e = x.shape
    hid = ffn_p["w1"].shape[1]

    # Row tile >= 256 when possible (amortizes per-grid-step overhead and gives the
    # two v7x TensorCores enough parallel steps); pad rows up rather than shrinking.
    tm = 256 if n >= 256 else max(8, pl.cdiv(n, 8) * 8)
    n_pad = pl.cdiv(n, tm) * tm
    x_in = jnp.pad(x, ((0, n_pad - n), (0, 0))) if n_pad != n else x

    w1 = ffn_p["w1"].astype(jnp.bfloat16)
    b1 = ffn_p["b1"].reshape(1, hid).astype(jnp.float32)
    w2 = ffn_p["w2"].astype(jnp.bfloat16)
    b2 = ffn_p["b2"].reshape(1, e).astype(jnp.float32)
    gamma = norm_p["g"].reshape(1, e).astype(jnp.float32)
    beta = norm_p["b"].reshape(1, e).astype(jnp.float32)

    out = pl.pallas_call(
        functools.partial(_ffn_block_kernel, eps=eps),
        out_shape=jax.ShapeDtypeStruct((n_pad, e), x.dtype),
        grid=(n_pad // tm,),
        in_specs=[
            pl.BlockSpec((tm, e), lambda i: (i, 0)),
            _const_spec((e, hid), 1),
            _const_spec((1, hid), 1),
            _const_spec((hid, e), 1),
            _const_spec((1, e), 1),
            _const_spec((1, e), 1),
            _const_spec((1, e), 1),
        ],
        out_specs=pl.BlockSpec((tm, e), lambda i: (i, 0)),
        compiler_params=pltpu.CompilerParams(
            dimension_semantics=("parallel",),
            vmem_limit_bytes=_vmem_limit_bytes()),
    )(x_in, w1, b1, w2, b2, gamma, beta)
    return out[:n] if n_pad != n else out


# ----------------------------------------------------------------------------
# Decoder layer (3 fused pallas_calls; positional adds are tiny elementwise JAX ops)
# ----------------------------------------------------------------------------
def decoder_layer(tgt, memory, params, num_heads,
                  tgt_mask=None, memory_mask=None, query_pos=None, pos=None):
    b, st, e = tgt.shape

    def with_pos(x, posx):
        return x if posx is None else x + posx

    # masked self-attention + add & LN (residual = tgt; q == k, v == residual)
    qk = with_pos(tgt, query_pos)
    x1 = attention_block(qk, qk, tgt, tgt,
                         params["masked_attn"], params["masked_attn_norm"],
                         num_heads, mask=tgt_mask)

    # cross-attention + add & LN (residual = x1)
    q2 = with_pos(x1, query_pos)
    k2 = with_pos(memory, pos)
    x2 = attention_block(q2, k2, memory, x1,
                         params["cross_attn"], params["cross_attn_norm"],
                         num_heads, mask=memory_mask)

    # feed-forward + add & LN (residual = x2)
    out = ffn_block(x2.reshape(b * st, e), params["ffn"], params["ffn_norm"])
    return out.reshape(b, st, e)


# ----------------------------------------------------------------------------
# Deterministic parameter init (matmul weights stored bf16 in HBM; biases / LN f32)
# ----------------------------------------------------------------------------
def init_params(key, embed_dim, num_hidden, qkv_bias=False):
    ks = jax.random.split(key, 4)
    std = 0.02
    wdt = jnp.bfloat16

    def w(k, din, dout):
        return (jax.random.normal(k, (din, dout), jnp.float32) * std).astype(wdt)

    def mha_params(k):
        kq, kk, kv, ko = jax.random.split(k, 4)
        wqkv = jnp.stack([w(kq, embed_dim, embed_dim),
                          w(kk, embed_dim, embed_dim),
                          w(kv, embed_dim, embed_dim)], axis=0)       # (3, E, E)
        bqkv = jnp.zeros((3, embed_dim), jnp.float32)                 # qkv_bias=False
        return dict(wqkv=wqkv, bqkv=bqkv,
                    wo=w(ko, embed_dim, embed_dim),
                    bo=jnp.zeros((embed_dim,), jnp.float32))

    def ln_params():
        return dict(g=jnp.ones((embed_dim,), jnp.float32),
                    b=jnp.zeros((embed_dim,), jnp.float32))

    return dict(
        masked_attn=mha_params(ks[0]),
        masked_attn_norm=ln_params(),
        cross_attn=mha_params(ks[1]),
        cross_attn_norm=ln_params(),
        ffn=dict(w1=w(ks[2], embed_dim, num_hidden),
                 b1=jnp.zeros((num_hidden,), jnp.float32),
                 w2=w(ks[3], num_hidden, embed_dim),
                 b2=jnp.zeros((embed_dim,), jnp.float32)),
        ffn_norm=ln_params(),
    )


# ----------------------------------------------------------------------------
if __name__ == "__main__":
    B, S_TGT, S_MEM = 2, 8, 8
    EMBED, HEADS, HIDDEN = 32, 4, 64

    key = jax.random.PRNGKey(0)
    k_tgt, k_mem, k_qpos, k_pos, k_par = jax.random.split(key, 5)

    tgt = jax.random.normal(k_tgt, (B, S_TGT, EMBED), jnp.float32)
    memory = jax.random.normal(k_mem, (B, S_MEM, EMBED), jnp.float32)
    query_pos = jax.random.normal(k_qpos, (B, S_TGT, EMBED), jnp.float32) * 0.1
    pos = jax.random.normal(k_pos, (B, S_MEM, EMBED), jnp.float32) * 0.1

    # causal additive mask in its natural (Sq, Sk) shape (exercises the mask path);
    # memory_mask=None exercises the no-mask (no DMA) path.
    tgt_mask = jnp.triu(jnp.full((S_TGT, S_TGT), -1e9, jnp.float32), k=1)

    params = init_params(k_par, EMBED, HIDDEN, qkv_bias=False)

    out = decoder_layer(tgt, memory, params, HEADS,
                        tgt_mask=tgt_mask, memory_mask=None,
                        query_pos=query_pos, pos=pos)
    out = jax.block_until_ready(out)
    assert out.shape == (B, S_TGT, EMBED)
    assert bool(jnp.all(jnp.isfinite(out)))
    print("KERNEL_OK")
</pallas_src>

<mosaic_0001>
module attributes {stable_mosaic.version = 11 : i64} {
  func.func @_attn_block_kernel(%arg0: i32, %arg1: i32, %arg2: memref<1x8x32xf32, #tpu.memory_space<vmem>>, %arg3: memref<1x8x32xf32, #tpu.memory_space<vmem>>, %arg4: memref<8x8xf32, #tpu.memory_space<vmem>>, %arg5: memref<3x32x32xbf16, #tpu.memory_space<vmem>>, %arg6: memref<3x1x32xf32, #tpu.memory_space<vmem>>, %arg7: memref<32x32xbf16, #tpu.memory_space<vmem>>, %arg8: memref<1x32xf32, #tpu.memory_space<vmem>>, %arg9: memref<1x32xf32, #tpu.memory_space<vmem>>, %arg10: memref<1x32xf32, #tpu.memory_space<vmem>>, %arg11: memref<1x8x32xf32, #tpu.memory_space<vmem>>, %arg12: memref<8x32xf32, #tpu.memory_space<vmem>>) attributes {dimension_semantics = [#tpu.dimension_semantics<parallel>, #tpu.dimension_semantics<parallel>], iteration_bounds = array<i64: 2, 1>, scalar_prefetch = 0 : i64, scratch_operands = 1 : i64, tpu.core_type = #tpu.core_type<tc>, window_params = [{transform_indices = @transform_0, window_bounds = array<i64: 1, 8, 32>}, {transform_indices = @transform_1, window_bounds = array<i64: 1, 8, 32>}, {transform_indices = @transform_2, window_bounds = array<i64: 8, 8>}, {pipeline_mode = #tpu.pipeline_mode<synchronous>, transform_indices = @transform_3, window_bounds = array<i64: 3, 32, 32>}, {pipeline_mode = #tpu.pipeline_mode<synchronous>, transform_indices = @transform_4, window_bounds = array<i64: 3, 1, 32>}, {pipeline_mode = #tpu.pipeline_mode<synchronous>, transform_indices = @transform_5, window_bounds = array<i64: 32, 32>}, {pipeline_mode = #tpu.pipeline_mode<synchronous>, transform_indices = @transform_6, window_bounds = array<i64: 1, 32>}, {pipeline_mode = #tpu.pipeline_mode<synchronous>, transform_indices = @transform_7, window_bounds = array<i64: 1, 32>}, {pipeline_mode = #tpu.pipeline_mode<synchronous>, transform_indices = @transform_8, window_bounds = array<i64: 1, 32>}, {transform_indices = @transform_9, window_bounds = array<i64: 1, 8, 32>}]} {
    %c0 = arith.constant 0 : index
    %c0_0 = arith.constant 0 : index
    %c0_1 = arith.constant 0 : index
    %0 = vector.load %arg2[%c0, %c0_0, %c0_1] : memref<1x8x32xf32, #tpu.memory_space<vmem>>, vector<1x8x32xf32>
    %1 = vector.shape_cast %0 : vector<1x8x32xf32> to vector<8x32xf32>
    %2 = arith.truncf %1 : vector<8x32xf32> to vector<8x32xbf16>
    %c0_2 = arith.constant 0 : index
    %c0_3 = arith.constant 0 : index
    %c0_4 = arith.constant 0 : index
    %3 = vector.load %arg2[%c0_2, %c0_3, %c0_4] : memref<1x8x32xf32, #tpu.memory_space<vmem>>, vector<1x8x32xf32>
    %4 = vector.shape_cast %3 : vector<1x8x32xf32> to vector<8x32xf32>
    %5 = arith.truncf %4 : vector<8x32xf32> to vector<8x32xbf16>
    %c0_5 = arith.constant 0 : index
    %c0_6 = arith.constant 0 : index
    %c0_7 = arith.constant 0 : index
    %6 = vector.load %arg3[%c0_5, %c0_6, %c0_7] : memref<1x8x32xf32, #tpu.memory_space<vmem>>, vector<1x8x32xf32>
    %7 = vector.shape_cast %6 : vector<1x8x32xf32> to vector<8x32xf32>
    %8 = arith.truncf %7 : vector<8x32xf32> to vector<8x32xbf16>
    %c0_8 = arith.constant 0 : index
    %c0_9 = arith.constant 0 : index
    %c0_10 = arith.constant 0 : index
    %9 = vector.load %arg5[%c0_8, %c0_9, %c0_10] : memref<3x32x32xbf16, #tpu.memory_space<vmem>>, vector<1x32x32xbf16>
    %10 = vector.shape_cast %9 : vector<1x32x32xbf16> to vector<32x32xbf16>
    %cst = arith.constant dense<0.000000e+00> : vector<8x32xf32>
    %11 = tpu.matmul %2, %10, %cst {dimension_numbers = #tpu.dot_dimension_numbers<[1], [0], [0], [1], [0, 0, 1, 1], [], []>} : vector<8x32xbf16>, vector<32x32xbf16>, vector<8x32xf32> -> vector<8x32xf32>
    %c0_11 = arith.constant 0 : index
    %c0_12 = arith.constant 0 : index
    %c0_13 = arith.constant 0 : index
    %12 = vector.load %arg6[%c0_11, %c0_12, %c0_13] : memref<3x1x32xf32, #tpu.memory_space<vmem>>, vector<1x1x32xf32>
    %13 = vector.shape_cast %12 : vector<1x1x32xf32> to vector<1x32xf32>
    %14 = vector.broadcast %13 : vector<1x32xf32> to vector<8x32xf32>
    %15 = arith.addf %11, %14 : vector<8x32xf32>
    %c1 = arith.constant 1 : index
    %c0_14 = arith.constant 0 : index
    %c0_15 = arith.constant 0 : index
    %16 = vector.load %arg5[%c1, %c0_14, %c0_15] : memref<3x32x32xbf16, #tpu.memory_space<vmem>>, vector<1x32x32xbf16>
    %17 = vector.shape_cast %16 : vector<1x32x32xbf16> to vector<32x32xbf16>
    %cst_16 = arith.constant dense<0.000000e+00> : vector<8x32xf32>
    %18 = tpu.matmul %5, %17, %cst_16 {dimension_numbers = #tpu.dot_dimension_numbers<[1], [0], [0], [1], [0, 0, 1, 1], [], []>} : vector<8x32xbf16>, vector<32x32xbf16>, vector<8x32xf32> -> vector<8x32xf32>
    %c1_17 = arith.constant 1 : index
    %c0_18 = arith.constant 0 : index
    %c0_19 = arith.constant 0 : index
    %19 = vector.load %arg6[%c1_17, %c0_18, %c0_19] : memref<3x1x32xf32, #tpu.memory_space<vmem>>, vector<1x1x32xf32>
    %20 = vector.shape_cast %19 : vector<1x1x32xf32> to vector<1x32xf32>
    %21 = vector.broadcast %20 : vector<1x32xf32> to vector<8x32xf32>
    %22 = arith.addf %18, %21 : vector<8x32xf32>
    %c2 = arith.constant 2 : index
    %c0_20 = arith.constant 0 : index
    %c0_21 = arith.constant 0 : index
    %23 = vector.load %arg5[%c2, %c0_20, %c0_21] : memref<3x32x32xbf16, #tpu.memory_space<vmem>>, vector<1x32x32xbf16>
    %24 = vector.shape_cast %23 : vector<1x32x32xbf16> to vector<32x32xbf16>
    %cst_22 = arith.constant dense<0.000000e+00> : vector<8x32xf32>
    %25 = tpu.matmul %8, %24, %cst_22 {dimension_numbers = #tpu.dot_dimension_numbers<[1], [0], [0], [1], [0, 0, 1, 1], [], []>} : vector<8x32xbf16>, vector<32x32xbf16>, vector<8x32xf32> -> vector<8x32xf32>
    %c2_23 = arith.constant 2 : index
    %c0_24 = arith.constant 0 : index
    %c0_25 = arith.constant 0 : index
    %26 = vector.load %arg6[%c2_23, %c0_24, %c0_25] : memref<3x1x32xf32, #tpu.memory_space<vmem>>, vector<1x1x32xf32>
    %27 = vector.shape_cast %26 : vector<1x1x32xf32> to vector<1x32xf32>
    %28 = vector.broadcast %27 : vector<1x32xf32> to vector<8x32xf32>
    %29 = arith.addf %25, %28 : vector<8x32xf32>
    %cst_26 = arith.constant 0.353553385 : f32
    %30 = vector.broadcast %cst_26 : f32 to vector<8x32xf32>
    %31 = arith.mulf %15, %30 : vector<8x32xf32>
    %32 = arith.truncf %31 : vector<8x32xf32> to vector<8x32xbf16>
    %33 = arith.truncf %22 : vector<8x32xf32> to vector<8x32xbf16>
    %34 = arith.truncf %29 : vector<8x32xf32> to vector<8x32xbf16>
    %c0_27 = arith.constant 0 : index
    %c0_28 = arith.constant 0 : index
    %35 = vector.load %arg4[%c0_27, %c0_28] : memref<8x8xf32, #tpu.memory_space<vmem>>, vector<8x8xf32>
    %36 = vector.extract_strided_slice %32 {offsets = [0, 0], sizes = [8, 8], strides = [1, 1]} : vector<8x32xbf16> to vector<8x8xbf16>
    %37 = vector.extract_strided_slice %33 {offsets = [0, 0], sizes = [8, 8], strides = [1, 1]} : vector<8x32xbf16> to vector<8x8xbf16>
    %cst_29 = arith.constant dense<0.000000e+00> : vector<8x8xf32>
    %38 = tpu.matmul %36, %37, %cst_29 {dimension_numbers = #tpu.dot_dimension_numbers<[1], [1], [0], [0], [0, 0, 1, 0], [], []>} : vector<8x8xbf16>, vector<8x8xbf16>, vector<8x8xf32> -> vector<8x8xf32>
    %39 = arith.addf %38, %35 : vector<8x8xf32>
    %cst_30 = arith.constant dense<0xFF800000> : vector<8xf32>
    %40 = vector.multi_reduction <maximumf>, %39, %cst_30 [1] : vector<8x8xf32> to vector<8xf32>
    %41 = vector.shape_cast %40 : vector<8xf32> to vector<8x1xf32>
    %42 = vector.broadcast %41 : vector<8x1xf32> to vector<8x8xf32>
    %43 = arith.subf %39, %42 : vector<8x8xf32>
    %44 = math.exp %43 : vector<8x8xf32>
    %cst_31 = arith.constant dense<0.000000e+00> : vector<8xf32>
    %45 = vector.multi_reduction <add>, %44, %cst_31 [1] : vector<8x8xf32> to vector<8xf32>
    %46 = vector.shape_cast %45 : vector<8xf32> to vector<8x1xf32>
    %47 = vector.broadcast %46 : vector<8x1xf32> to vector<8x8xf32>
    %48 = arith.divf %44, %47 : vector<8x8xf32>
    %49 = arith.truncf %48 : vector<8x8xf32> to vector<8x8xbf16>
    %50 = vector.extract_strided_slice %34 {offsets = [0, 0], sizes = [8, 8], strides = [1, 1]} : vector<8x32xbf16> to vector<8x8xbf16>
    %cst_32 = arith.constant dense<0.000000e+00> : vector<8x8xf32>
    %51 = tpu.matmul %49, %50, %cst_32 {dimension_numbers = #tpu.dot_dimension_numbers<[1], [0], [0], [1], [0, 0, 1, 1], [], []>} : vector<8x8xbf16>, vector<8x8xbf16>, vector<8x8xf32> -> vector<8x8xf32>
    %c0_33 = arith.constant 0 : index
    %c0_34 = arith.constant 0 : index
    %52 = vector.load %arg12[%c0_33, %c0_34] : memref<8x32xf32, #tpu.memory_space<vmem>>, vector<8x8xf32>
    tpu.vector_store %arg12[%c0_33, %c0_34], %51 {strides = array<i32>} : memref<8x32xf32, #tpu.memory_space<vmem>>, vector<8x8xf32>,
    %53 = vector.extract_strided_slice %32 {offsets = [0, 8], sizes = [8, 8], strides = [1, 1]} : vector<8x32xbf16> to vector<8x8xbf16>
    %54 = vector.extract_strided_slice %33 {offsets = [0, 8], sizes = [8, 8], strides = [1, 1]} : vector<8x32xbf16> to vector<8x8xbf16>
    %cst_35 = arith.constant dense<0.000000e+00> : vector<8x8xf32>
    %55 = tpu.matmul %53, %54, %cst_35 {dimension_numbers = #tpu.dot_dimension_numbers<[1], [1], [0], [0], [0, 0, 1, 0], [], []>} : vector<8x8xbf16>, vector<8x8xbf16>, vector<8x8xf32> -> vector<8x8xf32>
    %56 = arith.addf %55, %35 : vector<8x8xf32>
    %cst_36 = arith.constant dense<0xFF800000> : vector<8xf32>
    %57 = vector.multi_reduction <maximumf>, %56, %cst_36 [1] : vector<8x8xf32> to vector<8xf32>
    %58 = vector.shape_cast %57 : vector<8xf32> to vector<8x1xf32>
    %59 = vector.broadcast %58 : vector<8x1xf32> to vector<8x8xf32>
    %60 = arith.subf %56, %59 : vector<8x8xf32>
    %61 = math.exp %60 : vector<8x8xf32>
    %cst_37 = arith.constant dense<0.000000e+00> : vector<8xf32>
    %62 = vector.multi_reduction <add>, %61, %cst_37 [1] : vector<8x8xf32> to vector<8xf32>
    %63 = vector.shape_cast %62 : vector<8xf32> to vector<8x1xf32>
    %64 = vector.broadcast %63 : vector<8x1xf32> to vector<8x8xf32>
    %65 = arith.divf %61, %64 : vector<8x8xf32>
    %66 = arith.truncf %65 : vector<8x8xf32> to vector<8x8xbf16>
    %67 = vector.extract_strided_slice %34 {offsets = [0, 8], sizes = [8, 8], strides = [1, 1]} : vector<8x32xbf16> to vector<8x8xbf16>
    %cst_38 = arith.constant dense<0.000000e+00> : vector<8x8xf32>
    %68 = tpu.matmul %66, %67, %cst_38 {dimension_numbers = #tpu.dot_dimension_numbers<[1], [0], [0], [1], [0, 0, 1, 1], [], []>} : vector<8x8xbf16>, vector<8x8xbf16>, vector<8x8xf32> -> vector<8x8xf32>
    %c0_39 = arith.constant 0 : index
    %c8 = arith.constant 8 : index
    %69 = vector.load %arg12[%c0_39, %c8] : memref<8x32xf32, #tpu.memory_space<vmem>>, vector<8x8xf32>
    tpu.vector_store %arg12[%c0_39, %c8], %68 {strides = array<i32>} : memref<8x32xf32, #tpu.memory_space<vmem>>, vector<8x8xf32>,
    %70 = vector.extract_strided_slice %32 {offsets = [0, 16], sizes = [8, 8], strides = [1, 1]} : vector<8x32xbf16> to vector<8x8xbf16>
    %71 = vector.extract_strided_slice %33 {offsets = [0, 16], sizes = [8, 8], strides = [1, 1]} : vector<8x32xbf16> to vector<8x8xbf16>
    %cst_40 = arith.constant dense<0.000000e+00> : vector<8x8xf32>
    %72 = tpu.matmul %70, %71, %cst_40 {dimension_numbers = #tpu.dot_dimension_numbers<[1], [1], [0], [0], [0, 0, 1, 0], [], []>} : vector<8x8xbf16>, vector<8x8xbf16>, vector<8x8xf32> -> vector<8x8xf32>
    %73 = arith.addf %72, %35 : vector<8x8xf32>
    %cst_41 = arith.constant dense<0xFF800000> : vector<8xf32>
    %74 = vector.multi_reduction <maximumf>, %73, %cst_41 [1] : vector<8x8xf32> to vector<8xf32>
    %75 = vector.shape_cast %74 : vector<8xf32> to vector<8x1xf32>
    %76 = vector.broadcast %75 : vector<8x1xf32> to vector<8x8xf32>
    %77 = arith.subf %73, %76 : vector<8x8xf32>
    %78 = math.exp %77 : vector<8x8xf32>
    %cst_42 = arith.constant dense<0.000000e+00> : vector<8xf32>
    %79 = vector.multi_reduction <add>, %78, %cst_42 [1] : vector<8x8xf32> to vector<8xf32>
    %80 = vector.shape_cast %79 : vector<8xf32> to vector<8x1xf32>
    %81 = vector.broadcast %80 : vector<8x1xf32> to vector<8x8xf32>
    %82 = arith.divf %78, %81 : vector<8x8xf32>
    %83 = arith.truncf %82 : vector<8x8xf32> to vector<8x8xbf16>
    %84 = vector.extract_strided_slice %34 {offsets = [0, 16], sizes = [8, 8], strides = [1, 1]} : vector<8x32xbf16> to vector<8x8xbf16>
    %cst_43 = arith.constant dense<0.000000e+00> : vector<8x8xf32>
    %85 = tpu.matmul %83, %84, %cst_43 {dimension_numbers = #tpu.dot_dimension_numbers<[1], [0], [0], [1], [0, 0, 1, 1], [], []>} : vector<8x8xbf16>, vector<8x8xbf16>, vector<8x8xf32> -> vector<8x8xf32>
    %c0_44 = arith.constant 0 : index
    %c16 = arith.constant 16 : index
    %86 = vector.load %arg12[%c0_44, %c16] : memref<8x32xf32, #tpu.memory_space<vmem>>, vector<8x8xf32>
    tpu.vector_store %arg12[%c0_44, %c16], %85 {strides = array<i32>} : memref<8x32xf32, #tpu.memory_space<vmem>>, vector<8x8xf32>,
    %87 = vector.extract_strided_slice %32 {offsets = [0, 24], sizes = [8, 8], strides = [1, 1]} : vector<8x32xbf16> to vector<8x8xbf16>
    %88 = vector.extract_strided_slice %33 {offsets = [0, 24], sizes = [8, 8], strides = [1, 1]} : vector<8x32xbf16> to vector<8x8xbf16>
    %cst_45 = arith.constant dense<0.000000e+00> : vector<8x8xf32>
    %89 = tpu.matmul %87, %88, %cst_45 {dimension_numbers = #tpu.dot_dimension_numbers<[1], [1], [0], [0], [0, 0, 1, 0], [], []>} : vector<8x8xbf16>, vector<8x8xbf16>, vector<8x8xf32> -> vector<8x8xf32>
    %90 = arith.addf %89, %35 : vector<8x8xf32>
    %cst_46 = arith.constant dense<0xFF800000> : vector<8xf32>
    %91 = vector.multi_reduction <maximumf>, %90, %cst_46 [1] : vector<8x8xf32> to vector<8xf32>
    %92 = vector.shape_cast %91 : vector<8xf32> to vector<8x1xf32>
    %93 = vector.broadcast %92 : vector<8x1xf32> to vector<8x8xf32>
    %94 = arith.subf %90, %93 : vector<8x8xf32>
    %95 = math.exp %94 : vector<8x8xf32>
    %cst_47 = arith.constant dense<0.000000e+00> : vector<8xf32>
    %96 = vector.multi_reduction <add>, %95, %cst_47 [1] : vector<8x8xf32> to vector<8xf32>
    %97 = vector.shape_cast %96 : vector<8xf32> to vector<8x1xf32>
    %98 = vector.broadcast %97 : vector<8x1xf32> to vector<8x8xf32>
    %99 = arith.divf %95, %98 : vector<8x8xf32>
    %100 = arith.truncf %99 : vector<8x8xf32> to vector<8x8xbf16>
    %101 = vector.extract_strided_slice %34 {offsets = [0, 24], sizes = [8, 8], strides = [1, 1]} : vector<8x32xbf16> to vector<8x8xbf16>
    %cst_48 = arith.constant dense<0.000000e+00> : vector<8x8xf32>
    %102 = tpu.matmul %100, %101, %cst_48 {dimension_numbers = #tpu.dot_dimension_numbers<[1], [0], [0], [1], [0, 0, 1, 1], [], []>} : vector<8x8xbf16>, vector<8x8xbf16>, vector<8x8xf32> -> vector<8x8xf32>
    %c0_49 = arith.constant 0 : index
    %c24 = arith.constant 24 : index
    %103 = vector.load %arg12[%c0_49, %c24] : memref<8x32xf32, #tpu.memory_space<vmem>>, vector<8x8xf32>
    tpu.vector_store %arg12[%c0_49, %c24], %102 {strides = array<i32>} : memref<8x32xf32, #tpu.memory_space<vmem>>, vector<8x8xf32>,
    %c0_50 = arith.constant 0 : index
    %c0_51 = arith.constant 0 : index
    %104 = vector.load %arg12[%c0_50, %c0_51] : memref<8x32xf32, #tpu.memory_space<vmem>>, vector<8x32xf32>
    %105 = arith.truncf %104 : vector<8x32xf32> to vector<8x32xbf16>
    %c0_52 = arith.constant 0 : index
    %c0_53 = arith.constant 0 : index
    %106 = vector.load %arg7[%c0_52, %c0_53] : memref<32x32xbf16, #tpu.memory_space<vmem>>, vector<32x32xbf16>
    %cst_54 = arith.constant dense<0.000000e+00> : vector<8x32xf32>
    %107 = tpu.matmul %105, %106, %cst_54 {dimension_numbers = #tpu.dot_dimension_numbers<[1], [0], [0], [1], [0, 0, 1, 1], [], []>} : vector<8x32xbf16>, vector<32x32xbf16>, vector<8x32xf32> -> vector<8x32xf32>
    %c0_55 = arith.constant 0 : index
    %c0_56 = arith.constant 0 : index
    %108 = vector.load %arg8[%c0_55, %c0_56] : memref<1x32xf32, #tpu.memory_space<vmem>>, vector<1x32xf32>
    %109 = vector.broadcast %108 : vector<1x32xf32> to vector<8x32xf32>
    %110 = arith.addf %107, %109 : vector<8x32xf32>
    %c0_57 = arith.constant 0 : index
    %c0_58 = arith.constant 0 : index
    %c0_59 = arith.constant 0 : index
    %111 = vector.load %arg3[%c0_57, %c0_58, %c0_59] : memref<1x8x32xf32, #tpu.memory_space<vmem>>, vector<1x8x32xf32>
    %112 = vector.shape_cast %111 : vector<1x8x32xf32> to vector<8x32xf32>
    %113 = arith.addf %112, %110 : vector<8x32xf32>
    %cst_60 = arith.constant dense<0.000000e+00> : vector<8xf32>
    %114 = vector.multi_reduction <add>, %113, %cst_60 [1] : vector<8x32xf32> to vector<8xf32>
    %115 = vector.shape_cast %114 : vector<8xf32> to vector<8x1xf32>
    %cst_61 = arith.constant 3.200000e+01 : f32
    %116 = vector.broadcast %cst_61 : f32 to vector<8x1xf32>
    %117 = arith.divf %115, %116 : vector<8x1xf32>
    %118 = vector.broadcast %117 : vector<8x1xf32> to vector<8x32xf32>
    %119 = arith.subf %113, %118 : vector<8x32xf32>
    %120 = vector.broadcast %117 : vector<8x1xf32> to vector<8x32xf32>
    %121 = arith.subf %113, %120 : vector<8x32xf32>
    %122 = arith.mulf %119, %121 : vector<8x32xf32>
    %cst_62 = arith.constant dense<0.000000e+00> : vector<8xf32>
    %123 = vector.multi_reduction <add>, %122, %cst_62 [1] : vector<8x32xf32> to vector<8xf32>
    %124 = vector.shape_cast %123 : vector<8xf32> to vector<8x1xf32>
    %cst_63 = arith.constant 3.200000e+01 : f32
    %125 = vector.broadcast %cst_63 : f32 to vector<8x1xf32>
    %126 = arith.divf %124, %125 : vector<8x1xf32>
    %127 = vector.broadcast %117 : vector<8x1xf32> to vector<8x32xf32>
    %128 = arith.subf %113, %127 : vector<8x32xf32>
    %cst_64 = arith.constant 9.99999974E-6 : f32
    %129 = vector.broadcast %cst_64 : f32 to vector<8x1xf32>
    %130 = arith.addf %126, %129 : vector<8x1xf32>
    %131 = math.rsqrt %130 : vector<8x1xf32>
    %132 = vector.broadcast %131 : vector<8x1xf32> to vector<8x32xf32>
    %133 = arith.mulf %128, %132 : vector<8x32xf32>
    %c0_65 = arith.constant 0 : index
    %c0_66 = arith.constant 0 : index
    %134 = vector.load %arg9[%c0_65, %c0_66] : memref<1x32xf32, #tpu.memory_space<vmem>>, vector<1x32xf32>
    %135 = vector.broadcast %134 : vector<1x32xf32> to vector<8x32xf32>
    %136 = arith.mulf %133, %135 : vector<8x32xf32>
    %c0_67 = arith.constant 0 : index
    %c0_68 = arith.constant 0 : index
    %137 = vector.load %arg10[%c0_67, %c0_68] : memref<1x32xf32, #tpu.memory_space<vmem>>, vector<1x32xf32>
    %138 = vector.broadcast %137 : vector<1x32xf32> to vector<8x32xf32>
    %139 = arith.addf %136, %138 : vector<8x32xf32>
    %c0_69 = arith.constant 0 : index
    %c0_70 = arith.constant 0 : index
    %c0_71 = arith.constant 0 : index
    %140 = vector.load %arg11[%c0_69, %c0_70, %c0_71] : memref<1x8x32xf32, #tpu.memory_space<vmem>>, vector<1x8x32xf32>
    %141 = vector.shape_cast %140 : vector<1x8x32xf32> to vector<8x32xf32>
    %142 = vector.shape_cast %139 : vector<8x32xf32> to vector<1x8x32xf32>
    tpu.vector_store %arg11[%c0_69, %c0_70, %c0_71], %142 {strides = array<i32>} : memref<1x8x32xf32, #tpu.memory_space<vmem>>, vector<1x8x32xf32>,
    return
  }
  func.func @transform_0(%arg0: i32, %arg1: i32) -> (i32, i32, i32) {
    %c0_i32 = arith.constant 0 : i32
    %c0_i32_0 = arith.constant 0 : i32
    return %arg0, %arg1, %c0_i32 : i32, i32, i32
  }
  func.func @transform_1(%arg0: i32, %arg1: i32) -> (i32, i32, i32) {
    %c0_i32 = arith.constant 0 : i32
    %c0_i32_0 = arith.constant 0 : i32
    %c0_i32_1 = arith.constant 0 : i32
    return %arg0, %c0_i32, %c0_i32_0 : i32, i32, i32
  }
  func.func @transform_2(%arg0: i32, %arg1: i32) -> (i32, i32) {
    %c0_i32 = arith.constant 0 : i32
    %c0_i32_0 = arith.constant 0 : i32
    return %arg1, %c0_i32 : i32, i32
  }
  func.func @transform_3(%arg0: i32, %arg1: i32) -> (i32, i32, i32) {
    %c0_i32 = arith.constant 0 : i32
    %c0_i32_0 = arith.constant 0 : i32
    %c0_i32_1 = arith.constant 0 : i32
    %c0_i32_2 = arith.constant 0 : i32
    return %c0_i32, %c0_i32_0, %c0_i32_1 : i32, i32, i32
  }
  func.func @transform_4(%arg0: i32, %arg1: i32) -> (i32, i32, i32) {
    %c0_i32 = arith.constant 0 : i32
    %c0_i32_0 = arith.constant 0 : i32
    %c0_i32_1 = arith.constant 0 : i32
    %c0_i32_2 = arith.constant 0 : i32
    return %c0_i32, %c0_i32_0, %c0_i32_1 : i32, i32, i32
  }
  func.func @transform_5(%arg0: i32, %arg1: i32) -> (i32, i32) {
    %c0_i32 = arith.constant 0 : i32
    %c0_i32_0 = arith.constant 0 : i32
    %c0_i32_1 = arith.constant 0 : i32
    return %c0_i32, %c0_i32_0 : i32, i32
  }
  func.func @transform_6(%arg0: i32, %arg1: i32) -> (i32, i32) {
    %c0_i32 = arith.constant 0 : i32
    %c0_i32_0 = arith.constant 0 : i32
    %c0_i32_1 = arith.constant 0 : i32
    return %c0_i32, %c0_i32_0 : i32, i32
  }
  func.func @transform_7(%arg0: i32, %arg1: i32) -> (i32, i32) {
    %c0_i32 = arith.constant 0 : i32
    %c0_i32_0 = arith.constant 0 : i32
    %c0_i32_1 = arith.constant 0 : i32
    return %c0_i32, %c0_i32_0 : i32, i32
  }
  func.func @transform_8(%arg0: i32, %arg1: i32) -> (i32, i32) {
    %c0_i32 = arith.constant 0 : i32
    %c0_i32_0 = arith.constant 0 : i32
    %c0_i32_1 = arith.constant 0 : i32
    return %c0_i32, %c0_i32_0 : i32, i32
  }
  func.func @transform_9(%arg0: i32, %arg1: i32) -> (i32, i32, i32) {
    %c0_i32 = arith.constant 0 : i32
    %c0_i32_0 = arith.constant 0 : i32
    return %arg0, %arg1, %c0_i32 : i32, i32, i32
  }
}

</mosaic_0001>

<llo_original>
// kernel: tpu_custom_call.1
$region0: #{tpu_custom_call.1}
  #allocation0 [shape = 'u32[]', space=smem, size = 0x4, offset = 0x4, fixed_abs, tag = 'smem constant byte address 0x4 - core index']
  #allocation1 [shape = 'u32[144,128]{1,0:T(1,128)}', space=vmem, size = 0x12000, scoped, tag = 'internal scratch']
  #allocation2 [shape = 'f32[8,32]{1,0:T(8,128)}', space=vmem, size = 0x1000, scoped, tag = 'scratch operand']
  %s0 = inlined_call_operand.hbm [shape: f32[2,8,32], index: 0, kind: input, shape index: {}]
  %s1 = inlined_call_operand.hbm [shape: f32[2,8,32], index: 1, kind: input, shape index: {}]
  %s2 = inlined_call_operand.hbm [shape: f32[8,8], index: 2, kind: input, shape index: {}]
  %s3 = inlined_call_operand.hbm [shape: bf16[3,32,32], index: 3, kind: input, shape index: {}]
  %s4 = inlined_call_operand.hbm [shape: f32[3,1,32], index: 4, kind: input, shape index: {}]
  %s5 = inlined_call_operand.vmem [shape: bf16[32,32], index: 5, kind: input, shape index: {}]
  %s6 = inlined_call_operand.vmem [shape: f32[1,32], index: 6, kind: input, shape index: {}]
  %s7 = inlined_call_operand.vmem [shape: f32[1,32], index: 7, kind: input, shape index: {}]
  %s8 = inlined_call_operand.vmem [shape: f32[1,32], index: 8, kind: input, shape index: {}]
  %s9 = inlined_call_operand.hbm [shape: f32[2,8,32], index: 9, kind: output, shape index: {}]
  %s10 = sld [smem:[#allocation0]]
  $region89: #{tpu_custom_call.1} parent=0
    _
  %s12 = ssub.s32 1, %s10
  %s13 = scalar_select 0, %s12, %s10
  $region1: #{tpu_custom_call.1} parent=0
    #allocation3 [shape = 'u8[8192]{0}', space=vmem, size = 0x2000, scoped, tag = 'input window, operand 0']
    #allocation4 [shape = 's32[2]{0}', space=sflag, size = 0x8, scoped, tag = 'scoped memory for tpu_custom_call.1']
    #allocation5 [shape = 's32[2]{0}', space=sflag, size = 0x8, scoped, tag = 'scoped memory for tpu_custom_call.1']
    #allocation6 [shape = 'u8[8192]{0}', space=vmem, size = 0x2000, scoped, tag = 'input window, operand 1']
    #allocation7 [shape = 's32[2]{0}', space=sflag, size = 0x8, scoped, tag = 'scoped memory for tpu_custom_call.1']
    #allocation8 [shape = 'u8[4096]{0}', space=vmem, size = 0x1000, scoped, tag = 'input window, operand 2, single buffered']
    #allocation9 [shape = 'u8[24576]{0}', space=vmem, size = 0x6000, scoped, tag = 'input window, operand 3, single buffered']
    #allocation10 [shape = 's32[1]{0}', space=sflag, size = 0x4, scoped, tag = 'scoped memory for tpu_custom_call.1']
    #allocation11 [shape = 'u8[1536]{0}', space=vmem, size = 0x800, scoped, tag = 'input window, operand 4, single buffered']
    #allocation12 [shape = 'u8[8192]{0}', space=vmem, size = 0x2000, scoped, tag = 'output window, operand 0']
    %14 = vsyncpa [#allocation4], 0
    %s15 = scalar_lea.sflag [#allocation4], 1
    %16 = vsyncpa %s15, 0
    %17 = vsyncpa [#allocation7], 0
    %s18 = scalar_lea.sflag [#allocation7], 1
    %19 = vsyncpa %s18, 0
    %20 = vsyncpa [#allocation10], 0
    %21 = vsyncpa [#allocation5], 0
    %s22 = scalar_lea.sflag [#allocation5], 1
    %23 = vsyncpa %s22, 0
    loop: start=0, step=1, limit=4
    $region2: #{tpu_custom_call.1} parent=1 // loop_pre_header
      _
    $region3: #{tpu_custom_call.1} parent=1 // loop_header
      %s25 = sphi 0, %s29
      %p26 = scmp.ge.s32.totalorder %s25, 4
      %s32 = sphi 0, %s44
      %s33 = sphi 0, %s40
      %s34 = sphi 0, %s32
      %s35 = sphi 0, %s33
      %s36 = sphi 0, %s34
      %s37 = sphi 0, %s35
      %s49 = sphi 0, %s51
      %s52 = sphi 0, %s49
      %s53 = sphi 0, %s52
      %s69 = sphi 0, %s53
      %s75 = sphi 0, %s77
      %s78 = sphi 0, %s75
      %s79 = sphi 0, %s78
      %s95 = sphi 0, %s79
      %s101 = sphi 0, %s103
      %s104 = sphi 0, %s101
      %s105 = sphi 0, %s104
      %s121 = sphi 0, %s105
      %s125 = sphi 0, %s125
      %s127 = sphi 0, %s125
      %s128 = sphi 0, %s127
      %s142 = sphi 0, %s128
      %s146 = sphi 0, %s146
      %s148 = sphi 0, %s146
      %s149 = sphi 0, %s148
      %s163 = sphi 0, %s149
      %s167 = sphi 0, %s167
      %s169 = sphi 0, %s167
      %s170 = sphi 0, %s169
      %s184 = sphi 0, %s170
      %s188 = sphi 0, %s188
      %s190 = sphi 0, %s188
      %s191 = sphi 0, %s190
      %s205 = sphi 0, %s191
      %s209 = sphi 0, %s209
      %s211 = sphi 0, %s209
      %s212 = sphi 0, %s211
      %s226 = sphi 0, %s212
      %s230 = sphi 0, %s230
      %s232 = sphi 0, %s230
      %s233 = sphi 0, %s232
      %s247 = sphi 0, %s233
      %s255 = sphi 0, %s257
      %s258 = sphi 0, %s255
      %s259 = sphi 0, %s258
      %s275 = sphi 0, %s259
    $region4: #{tpu_custom_call.1} parent=1 // loop_header_branch
      %28 = sbr.rel (%p26) target = $region8
    $region5: #{tpu_custom_call.1} parent=1 // loop_body
      %s30 = ssub.s32 %s25, 1
      %s31 = ssub.s32 %s25, 2
      %s38 = sadd.s32 1, %s33
      %p39 = scmp.ge.s32.totalorder %s38, 1
      %s40 = scalar_select %p39, 0, %s38
      %s41 = sadd.s32 1, %s32
      %s42 = scalar_select %p39, %s41, %s32
      %p43 = scmp.ge.s32.totalorder %s42, 2
      %s44 = scalar_select %p43, 0, %s42
      %s45 = ssub.s32 %s32, %s44
      %s46 = ssub.s32 %s33, %s40
      %s47 = sor.u32 %s45, %s46
      %p48 = scmp.eq.s32.totalorder %s47, 0
      %s50 = sadd.s32 %s49, 1
      %s51 = scalar_select %p48, %s49, %s50
      %p54 = pneg %p48
      %p55 = scmp.eq.s32.totalorder %s25, 1
      %p56 = por %p54, %p55
      %p57 = scmp.ne.s32.totalorder %s49, %s52
      %p58 = scmp.eq.s32.totalorder %s25, 0
      %p59 = por %p57, %p58
      %p60 = scmp.ne.s32.totalorder %s49, %s52
      %p61 = scmp.eq.s32.totalorder %s30, 1
      %p62 = por %p60, %p61
      %p63 = scmp.ne.s32.totalorder %s52, %s53
      %p64 = scmp.eq.s32.totalorder %s30, 0
      %p65 = por %p63, %p64
      %p66 = scmp.ne.s32.totalorder %s52, %s53
      %p67 = scmp.eq.s32.totalorder %s31, 1
      %p68 = por %p66, %p67
      %p70 = scmp.ne.s32.totalorder %s53, %s69
      %p71 = scmp.eq.s32.totalorder %s31, 0
      %p72 = por %p70, %p71
      %s73 = ssub.s32 %s32, %s44
      %p74 = scmp.eq.s32.totalorder %s73, 0
      %s76 = sadd.s32 %s75, 1
      %s77 = scalar_select %p74, %s75, %s76
      %p80 = pneg %p74
      %p81 = scmp.eq.s32.totalorder %s25, 1
      %p82 = por %p80, %p81
      %p83 = scmp.ne.s32.totalorder %s75, %s78
      %p84 = scmp.eq.s32.totalorder %s25, 0
      %p85 = por %p83, %p84
      %p86 = scmp.ne.s32.totalorder %s75, %s78
      %p87 = scmp.eq.s32.totalorder %s30, 1
      %p88 = por %p86, %p87
      %p89 = scmp.ne.s32.totalorder %s78, %s79
      %p90 = scmp.eq.s32.totalorder %s30, 0
      %p91 = por %p89, %p90
      %p92 = scmp.ne.s32.totalorder %s78, %s79
      %p93 = scmp.eq.s32.totalorder %s31, 1
      %p94 = por %p92, %p93
      %p96 = scmp.ne.s32.totalorder %s79, %s95
      %p97 = scmp.eq.s32.totalorder %s31, 0
      %p98 = por %p96, %p97
      %s99 = ssub.s32 %s33, %s40
      %p100 = scmp.eq.s32.totalorder %s99, 0
      %s102 = sadd.s32 %s101, 1
      %s103 = scalar_select %p100, %s101, %s102
      %p106 = pneg %p100
      %p107 = scmp.eq.s32.totalorder %s25, 1
      %p108 = por %p106, %p107
      %p109 = scmp.ne.s32.totalorder %s101, %s104
      %p110 = scmp.eq.s32.totalorder %s25, 0
      %p111 = por %p109, %p110
      %p112 = scmp.ne.s32.totalorder %s101, %s104
      %p113 = scmp.eq.s32.totalorder %s30, 1
      %p114 = por %p112, %p113
      %p115 = scmp.ne.s32.totalorder %s104, %s105
      %p116 = scmp.eq.s32.totalorder %s30, 0
      %p117 = por %p115, %p116
      %p118 = scmp.ne.s32.totalorder %s104, %s105
      %p119 = scmp.eq.s32.totalorder %s31, 1
      %p120 = por %p118, %p119
      %p122 = scmp.ne.s32.totalorder %s105, %s121
      %p123 = scmp.eq.s32.totalorder %s31, 0
      %p124 = por %p122, %p123
      %s126 = sadd.s32 %s125, 1
      %p129 = scmp.eq.s32.totalorder %s25, 1
      %p130 = scmp.ne.s32.totalorder %s125, %s127
      %p131 = scmp.eq.s32.totalorder %s25, 0
      %p132 = por %p130, %p131
      %p133 = scmp.ne.s32.totalorder %s125, %s127
      %p134 = scmp.eq.s32.totalorder %s30, 1
      %p135 = por %p133, %p134
      %p136 = scmp.ne.s32.totalorder %s127, %s128
      %p137 = scmp.eq.s32.totalorder %s30, 0
      %p138 = por %p136, %p137
      %p139 = scmp.ne.s32.totalorder %s127, %s128
      %p140 = scmp.eq.s32.totalorder %s31, 1
      %p141 = por %p139, %p140
      %p143 = scmp.ne.s32.totalorder %s128, %s142
      %p144 = scmp.eq.s32.totalorder %s31, 0
      %p145 = por %p143, %p144
      %s147 = sadd.s32 %s146, 1
      %p150 = scmp.eq.s32.totalorder %s25, 1
      %p151 = scmp.ne.s32.totalorder %s146, %s148
      %p152 = scmp.eq.s32.totalorder %s25, 0
      %p153 = por %p151, %p152
      %p154 = scmp.ne.s32.totalorder %s146, %s148
      %p155 = scmp.eq.s32.totalorder %s30, 1
      %p156 = por %p154, %p155
      %p157 = scmp.ne.s32.totalorder %s148, %s149
      %p158 = scmp.eq.s32.totalorder %s30, 0
      %p159 = por %p157, %p158
      %p160 = scmp.ne.s32.totalorder %s148, %s149
      %p161 = scmp.eq.s32.totalorder %s31, 1
      %p162 = por %p160, %p161
      %p164 = scmp.ne.s32.totalorder %s149, %s163
      %p165 = scmp.eq.s32.totalorder %s31, 0
      %p166 = por %p164, %p165
      %s168 = sadd.s32 %s167, 1
      %p171 = scmp.eq.s32.totalorder %s25, 1
      %p172 = scmp.ne.s32.totalorder %s167, %s169
      %p173 = scmp.eq.s32.totalorder %s25, 0
      %p174 = por %p172, %p173
      %p175 = scmp.ne.s32.totalorder %s167, %s169
      %p176 = scmp.eq.s32.totalorder %s30, 1
      %p177 = por %p175, %p176
      %p178 = scmp.ne.s32.totalorder %s169, %s170
      %p179 = scmp.eq.s32.totalorder %s30, 0
      %p180 = por %p178, %p179
      %p181 = scmp.ne.s32.totalorder %s169, %s170
      %p182 = scmp.eq.s32.totalorder %s31, 1
      %p183 = por %p181, %p182
      %p185 = scmp.ne.s32.totalorder %s170, %s184
      %p186 = scmp.eq.s32.totalorder %s31, 0
      %p187 = por %p185, %p186
      %s189 = sadd.s32 %s188, 1
      %p192 = scmp.eq.s32.totalorder %s25, 1
      %p193 = scmp.ne.s32.totalorder %s188, %s190
      %p194 = scmp.eq.s32.totalorder %s25, 0
      %p195 = por %p193, %p194
      %p196 = scmp.ne.s32.totalorder %s188, %s190
      %p197 = scmp.eq.s32.totalorder %s30, 1
      %p198 = por %p196, %p197
      %p199 = scmp.ne.s32.totalorder %s190, %s191
      %p200 = scmp.eq.s32.totalorder %s30, 0
      %p201 = por %p199, %p200
      %p202 = scmp.ne.s32.totalorder %s190, %s191
      %p203 = scmp.eq.s32.totalorder %s31, 1
      %p204 = por %p202, %p203
      %p206 = scmp.ne.s32.totalorder %s191, %s205
      %p207 = scmp.eq.s32.totalorder %s31, 0
      %p208 = por %p206, %p207
      %s210 = sadd.s32 %s209, 1
      %p213 = scmp.eq.s32.totalorder %s25, 1
      %p214 = scmp.ne.s32.totalorder %s209, %s211
      %p215 = scmp.eq.s32.totalorder %s25, 0
      %p216 = por %p214, %p215
      %p217 = scmp.ne.s32.totalorder %s209, %s211
      %p218 = scmp.eq.s32.totalorder %s30, 1
      %p219 = por %p217, %p218
      %p220 = scmp.ne.s32.totalorder %s211, %s212
      %p221 = scmp.eq.s32.totalorder %s30, 0
      %p222 = por %p220, %p221
      %p223 = scmp.ne.s32.totalorder %s211, %s212
      %p224 = scmp.eq.s32.totalorder %s31, 1
      %p225 = por %p223, %p224
      %p227 = scmp.ne.s32.totalorder %s212, %s226
      %p228 = scmp.eq.s32.totalorder %s31, 0
      %p229 = por %p227, %p228
      %s231 = sadd.s32 %s230, 1
      %p234 = scmp.eq.s32.totalorder %s25, 1
      %p235 = scmp.ne.s32.totalorder %s230, %s232
      %p236 = scmp.eq.s32.totalorder %s25, 0
      %p237 = por %p235, %p236
      %p238 = scmp.ne.s32.totalorder %s230, %s232
      %p239 = scmp.eq.s32.totalorder %s30, 1
      %p240 = por %p238, %p239
      %p241 = scmp.ne.s32.totalorder %s232, %s233
      %p242 = scmp.eq.s32.totalorder %s30, 0
      %p243 = por %p241, %p242
      %p244 = scmp.ne.s32.totalorder %s232, %s233
      %p245 = scmp.eq.s32.totalorder %s31, 1
      %p246 = por %p244, %p245
      %p248 = scmp.ne.s32.totalorder %s233, %s247
      %p249 = scmp.eq.s32.totalorder %s31, 0
      %p250 = por %p248, %p249
      %s251 = ssub.s32 %s32, %s44
      %s252 = ssub.s32 %s33, %s40
      %s253 = sor.u32 %s251, %s252
      %p254 = scmp.eq.s32.totalorder %s253, 0
      %s256 = sadd.s32 %s255, 1
      %s257 = scalar_select %p254, %s255, %s256
      %p260 = pneg %p254
      %p261 = scmp.eq.s32.totalorder %s25, 1
      %p262 = por %p260, %p261
      %p263 = scmp.ne.s32.totalorder %s255, %s258
      %p264 = scmp.eq.s32.totalorder %s25, 0
      %p265 = por %p263, %p264
      %p266 = scmp.ne.s32.totalorder %s255, %s258
      %p267 = scmp.eq.s32.totalorder %s30, 1
      %p268 = por %p266, %p267
      %p269 = scmp.ne.s32.totalorder %s258, %s259
      %p270 = scmp.eq.s32.totalorder %s30, 0
      %p271 = por %p269, %p270
      %p272 = scmp.ne.s32.totalorder %s258, %s259
      %p273 = scmp.eq.s32.totalorder %s31, 1
      %p274 = por %p272, %p273
      %p276 = scmp.ne.s32.totalorder %s259, %s275
      %p277 = scmp.eq.s32.totalorder %s31, 0
      %p278 = por %p276, %p277
      %p279 = scmp.le.s32.totalorder 1, %s25
      %p280 = scmp.lt.s32.totalorder %s25, 3
      %p281 = pnand %p279, %p280
      %p282 = pneg %p281
      // Predicated region
      $region9: #{tpu_custom_call.1} parent=5 // pred_check
        _
      $region10: #{tpu_custom_call.1} parent=5 // pred_check_branch
        %284 = sbr.rel (%p281) target = $region12
      $region11: #{tpu_custom_call.1} parent=5 // pred_region
        %s285 = ssub.s32 %s25, 1
        // Predicated region
        $region13: #{tpu_custom_call.1} parent=11 // pred_check
          %p286 = pneg %p117
        $region14: #{tpu_custom_call.1} parent=11 // pred_check_branch
          %288 = sbr.rel (%p286) target = $region16
        $region15: #{tpu_custom_call.1} parent=11 // pred_region
          %s290 = ssub.s32 128, 128
          %291 = vsyncadd [#allocation7], %s290
          %s292 = smul.addr %s35, 128
          %s293 = scalar_lea.hbm %s2, %s292
          %s295 = sshll.u32 [#allocation8], 4
          %s296 = int_to_ptr.vmem [resolvable:$true] %s295
          %298 = dma.hbm_to_vmem [thread:$0]  %s293, 128, %s296, [#allocation7]
        $region16: #{tpu_custom_call.1} parent=11 // pred_fallthru
          _
        // Predicated region
        $region17: #{tpu_custom_call.1} parent=11 // pred_check
          %p299 = pneg %p138
        $region18: #{tpu_custom_call.1} parent=11 // pred_check_branch
          %301 = sbr.rel (%p299) target = $region20
        $region19: #{tpu_custom_call.1} parent=11 // pred_region
          %s303 = ssub.s32 768, 768
          %304 = vsyncadd [#allocation10], %s303
          %s305 = sshll.u32 [#allocation9], 4
          %s306 = int_to_ptr.vmem [resolvable:$true] %s305
          %311 = dma.hbm_to_vmem [thread:$0]  %s3, 768, %s306, [#allocation10], 64, 64, 4
        $region20: #{tpu_custom_call.1} parent=11 // pred_fallthru
          _
        // Predicated region
        $region21: #{tpu_custom_call.1} parent=11 // pred_check
          %p312 = pneg %p159
        $region22: #{tpu_custom_call.1} parent=11 // pred_check_branch
          %314 = sbr.rel (%p312) target = $region24
        $region23: #{tpu_custom_call.1} parent=11 // pred_region
          %s316 = ssub.s32 48, 48
          %317 = vsyncadd [#allocation10], %s316
          %s318 = sshll.u32 [#allocation11], 4
          %s319 = int_to_ptr.vmem [resolvable:$true] %s318
          %324 = dma.hbm_to_vmem [thread:$0]  %s4, 48, %s319, [#allocation10], 16, 16, 1
        $region24: #{tpu_custom_call.1} parent=11 // pred_fallthru
          _
        // Predicated region
        $region25: #{tpu_custom_call.1} parent=11 // pred_check
          %p325 = pneg %p180
        $region26: #{tpu_custom_call.1} parent=11 // pred_check_branch
          %327 = sbr.rel (%p325) target = $region28
        $region27: #{tpu_custom_call.1} parent=11 // pred_region
          _
        $region28: #{tpu_custom_call.1} parent=11 // pred_fallthru
          _
        // Predicated region
        $region29: #{tpu_custom_call.1} parent=11 // pred_check
          %p328 = pneg %p201
        $region30: #{tpu_custom_call.1} parent=11 // pred_check_branch
          %330 = sbr.rel (%p328) target = $region32
        $region31: #{tpu_custom_call.1} parent=11 // pred_region
          _
        $region32: #{tpu_custom_call.1} parent=11 // pred_fallthru
          _
        // Predicated region
        $region33: #{tpu_custom_call.1} parent=11 // pred_check
          %p331 = pneg %p222
        $region34: #{tpu_custom_call.1} parent=11 // pred_check_branch
          %333 = sbr.rel (%p331) target = $region36
        $region35: #{tpu_custom_call.1} parent=11 // pred_region
          _
        $region36: #{tpu_custom_call.1} parent=11 // pred_fallthru
          _
        // Predicated region
        $region37: #{tpu_custom_call.1} parent=11 // pred_check
          %p334 = pneg %p243
        $region38: #{tpu_custom_call.1} parent=11 // pred_check_branch
          %336 = sbr.rel (%p334) target = $region40
        $region39: #{tpu_custom_call.1} parent=11 // pred_region
          _
        $region40: #{tpu_custom_call.1} parent=11 // pred_fallthru
          _
      $region12: #{tpu_custom_call.1} parent=5 // pred_fallthru
        _
      %p337 = scmp.lt.s32.totalorder %s25, 2
      // Predicated region
      $region41: #{tpu_custom_call.1} parent=5 // pred_check
        %p338 = pneg %p337
      $region42: #{tpu_custom_call.1} parent=5 // pred_check_branch
        %340 = sbr.rel (%p338) target = $region44
      $region43: #{tpu_custom_call.1} parent=5 // pred_region
        // Predicated region
        $region45: #{tpu_custom_call.1} parent=43 // pred_check
          %p341 = pneg %p59
        $region46: #{tpu_custom_call.1} parent=43 // pred_check_branch
          %343 = sbr.rel (%p341) target = $region48
        $region47: #{tpu_custom_call.1} parent=43 // pred_region
          %s344 = sand.u32 %s49, 1
          %s345 = scalar_lea.sflag [#allocation4], %s344
          %s346 = sand.u32 %s49, 1
          %s347 = smul.addr %s346, 8
          %s348 = scalar_lea.vmem [#allocation3], %s347
          %s350 = ssub.s32 128, 128
          %351 = vsyncadd %s345, %s350
          %s352 = sadd.s32 %s33, %s32
          %s353 = smul.addr %s352, 128
          %s354 = scalar_lea.hbm %s0, %s353
          %s356 = sshll.u32 %s348, 4
          %s357 = int_to_ptr.vmem [resolvable:$true] %s356
          %359 = dma.hbm_to_vmem [thread:$0]  %s354, 128, %s357, %s345
        $region48: #{tpu_custom_call.1} parent=43 // pred_fallthru
          _
        // Predicated region
        $region49: #{tpu_custom_call.1} parent=43 // pred_check
          %p360 = pneg %p85
        $region50: #{tpu_custom_call.1} parent=43 // pred_check_branch
          %362 = sbr.rel (%p360) target = $region52
        $region51: #{tpu_custom_call.1} parent=43 // pred_region
          %s363 = sand.u32 %s25, 1
          %s364 = scalar_lea.sflag [#allocation7], %s363
          %s365 = sand.u32 %s75, 1
          %s366 = smul.addr %s365, 8
          %s367 = scalar_lea.vmem [#allocation6], %s366
          %s369 = ssub.s32 128, 128
          %370 = vsyncadd %s364, %s369
          %s371 = smul.addr %s32, 128
          %s372 = scalar_lea.hbm %s1, %s371
          %s374 = sshll.u32 %s367, 4
          %s375 = int_to_ptr.vmem [resolvable:$true] %s374
          %377 = dma.hbm_to_vmem [thread:$0]  %s372, 128, %s375, %s364
        $region52: #{tpu_custom_call.1} parent=43 // pred_fallthru
          _
      $region44: #{tpu_custom_call.1} parent=5 // pred_fallthru
        _
      %p378 = scmp.le.s32.totalorder 1, %s25
      %p379 = scmp.lt.s32.totalorder %s25, 3
      %p380 = pnand %p378, %p379
      %p381 = pneg %p380
      // Predicated region
      $region53: #{tpu_custom_call.1} parent=5 // pred_check
        _
      $region54: #{tpu_custom_call.1} parent=5 // pred_check_branch
        %383 = sbr.rel (%p380) target = $region56
      $region55: #{tpu_custom_call.1} parent=5 // pred_region
        %s384 = ssub.s32 %s25, 1
        %s385 = sand.u32 %s52, 1
        %s386 = scalar_lea.sflag [#allocation4], %s385
        %s387 = sand.u32 %s52, 1
        %s388 = smul.addr %s387, 8
        %s389 = scalar_lea.vmem [#allocation3], %s388
        // Predicated region
        $region57: #{tpu_custom_call.1} parent=55 // pred_check
          %p390 = pneg %p65
        $region58: #{tpu_custom_call.1} parent=55 // pred_check_branch
          %392 = sbr.rel (%p390) target = $region60
        $region59: #{tpu_custom_call.1} parent=55 // pred_region
          %393 = dma.done %s386, 128
        $region60: #{tpu_custom_call.1} parent=55 // pred_fallthru
          _
        %s394 = sand.u32 %s30, 1
        %s395 = scalar_lea.sflag [#allocation7], %s394
        %s396 = sand.u32 %s78, 1
        %s397 = smul.addr %s396, 8
        %s398 = scalar_lea.vmem [#allocation6], %s397
        // Predicated region
        $region61: #{tpu_custom_call.1} parent=55 // pred_check
          %p399 = pneg %p91
        $region62: #{tpu_custom_call.1} parent=55 // pred_check_branch
          %401 = sbr.rel (%p399) target = $region64
        $region63: #{tpu_custom_call.1} parent=55 // pred_region
          %402 = dma.done %s395, 128
        $region64: #{tpu_custom_call.1} parent=55 // pred_fallthru
          _
        // Predicated region
        $region65: #{tpu_custom_call.1} parent=55 // pred_check
          %p403 = pneg %p117
        $region66: #{tpu_custom_call.1} parent=55 // pred_check_branch
          %405 = sbr.rel (%p403) target = $region68
        $region67: #{tpu_custom_call.1} parent=55 // pred_region
          %406 = dma.done [#allocation7], 128
        $region68: #{tpu_custom_call.1} parent=55 // pred_fallthru
          _
        // Predicated region
        $region69: #{tpu_custom_call.1} parent=55 // pred_check
          %p407 = pneg %p138
        $region70: #{tpu_custom_call.1} parent=55 // pred_check_branch
          %409 = sbr.rel (%p407) target = $region72
        $region71: #{tpu_custom_call.1} parent=55 // pred_region
          %410 = dma.done [#allocation10], 768
        $region72: #{tpu_custom_call.1} parent=55 // pred_fallthru
          _
        // Predicated region
        $region73: #{tpu_custom_call.1} parent=55 // pred_check
          %p411 = pneg %p159
        $region74: #{tpu_custom_call.1} parent=55 // pred_check_branch
          %413 = sbr.rel (%p411) target = $region76
        $region75: #{tpu_custom_call.1} parent=55 // pred_region
          %414 = dma.done [#allocation10], 48
        $region76: #{tpu_custom_call.1} parent=55 // pred_fallthru
          _
        %s415 = sand.u32 %s52, 1
        %s416 = scalar_lea.sflag [#allocation4], %s415
        %s417 = sand.u32 %s52, 1
        %s418 = smul.addr %s417, 8
        %s419 = scalar_lea.vmem [#allocation3], %s418
        %p420 = pneg %p65
        %p421 = pneg %p62
        %s422 = sand.u32 %s30, 1
        %s423 = scalar_lea.sflag [#allocation7], %s422
        %s424 = sand.u32 %s78, 1
        %s425 = smul.addr %s424, 8
        %s426 = scalar_lea.vmem [#allocation6], %s425
        %p427 = pneg %p91
        %p428 = pneg %p88
        %p429 = pneg %p117
        %p430 = pneg %p114
        %p431 = pneg %p138
        %p432 = pneg %p135
        %p433 = pneg %p159
        %p434 = pneg %p156
        %p435 = pneg %p180
        %p436 = pneg %p177
        %p437 = pneg %p201
        %p438 = pneg %p198
        %p439 = pneg %p222
        %p440 = pneg %p219
        %p441 = pneg %p243
        %p442 = pneg %p240
        %p443 = pneg %p271
        %p444 = pneg %p268
        %s445 = sand.u32 %s258, 1
        %s446 = scalar_lea.sflag [#allocation5], %s445
        %s447 = sand.u32 %s258, 1
        %s448 = smul.addr %s447, 8
        %s449 = scalar_lea.vmem [#allocation12], %s448
        %v451 = vld [vmem:[%s389] sm:$0xff]
        %v452 = vpack.c.bf16 %v451, %v451
        %v453 = vld [vmem:[%s398] sm:$0xff]
        %v454 = vpack.c.bf16 %v453, %v453
        %v455 = vld [vmem:[#allocation9] sm:$0xf]
        %v456 = vld [vmem:[#allocation9 + $0x4] sm:$0xf]
        %v457 = vld [vmem:[#allocation9 + $0x8] sm:$0xf]
        %v458 = vld [vmem:[#allocation9 + $0xc] sm:$0xf]
        %v459 = vld [vmem:[#allocation11] sm:$0x1]
        %v461 = vlaneseq
        %v462 = vshrl.u32 %v461, 7
        %v463 = vsub.s32 0, %v462
        %v464 = vrot.slane %v459, %v463
        %v470 = vunpack.c.l.b16 %v455
        %v471 = vunpack.c.l.b16 %v456
        %v472 = vunpack.c.l.b16 %v457
        %v473 = vunpack.c.l.b16 %v458
        %v474 = vpack.c.b16 %v471, %v470
        %v475 = vpack.c.b16 %v473, %v472
        %vm478 = vcmask 261120
        %v480 = vsel %vm478, %v452, 0
        %482 = vmatprep.subr.bf16.mxu0 0
        %483 = vmatpush1.bf16.msra.mxu0 %v474
        %484 = vmatprep.subr.bf16.mxu0 0
        %485 = vmatpush1.bf16.msra.mxu0 %v475
        %486 = vmatprep.subr.bf16.mxu0 0
        %487 = vmatpush1.bf16.msra.mxu0 0
        %488 = vmatprep.subr.bf16.mxu0 0
        %489 = vmatpush1.bf16.msra.mxu0 0
        %490 = vmatprep.subr.bf16.mxu0 0
        %491 = vmatpush1.bf16.msra.mxu0 0
        %492 = vmatprep.subr.bf16.mxu0 0
        %493 = vmatpush1.bf16.msra.mxu0 0
        %494 = vmatprep.subr.bf16.mxu0 0
        %495 = vmatpush1.bf16.msra.mxu0 0
        %496 = vmatprep.subr.bf16.mxu0 0
        %497 = vmatpush1.bf16.msra.mxu0 0
        %498 = vmatprep.subr.bf16.mxu0 0
        %499 = vmatpush1.bf16.msra.mxu0 0
        %500 = vmatprep.subr.bf16.mxu0 0
        %501 = vmatpush1.bf16.msra.mxu0 0
        %502 = vmatprep.subr.bf16.mxu0 0
        %503 = vmatpush1.bf16.msra.mxu0 0
        %504 = vmatprep.subr.bf16.mxu0 0
        %505 = vmatpush1.bf16.msra.mxu0 0
        %506 = vmatprep.subr.bf16.mxu0 0
        %507 = vmatpush1.bf16.msra.mxu0 0
        %508 = vmatprep.subr.bf16.mxu0 0
        %509 = vmatpush1.bf16.msra.mxu0 0
        %510 = vmatprep.subr.bf16.mxu0 0
        %511 = vmatpush1.bf16.msra.mxu0 0
        %512 = vmatprep.subr.bf16.mxu0 0
        %513 = vmatpush1.bf16.msra.mxu0 0
        %514 = vmatprep.mubr.bf16.mxu0 0
        %515 = vmatmul.mubr.bf16.gmra.mrb[0].mxu0 %v480
        %v516 = vpop.f32.mrb[0].mxu0
        %v517 = vadd.f32 %v464, %v516
        %v518 = vpop.f32.mrb[0].mxu0
        %v519 = vpop.f32.mrb[0].mxu0
        %v520 = vpop.f32.mrb[0].mxu0
        %521 = vdwg.mxu0
        %s522 = scalar_lea.vmem [#allocation9], 16
        %v523 = vld [vmem:[%s522] sm:$0xf]
        %v524 = vld [vmem:[%s522 + $0x4] sm:$0xf]
        %v525 = vld [vmem:[%s522 + $0x8] sm:$0xf]
        %v526 = vld [vmem:[%s522 + $0xc] sm:$0xf]
        %s527 = scalar_lea.vmem [#allocation11], 1
        %v528 = vld [vmem:[%s527] sm:$0x1]
        %v530 = vlaneseq
        %v531 = vshrl.u32 %v530, 7
        %v532 = vsub.s32 0, %v531
        %v533 = vrot.slane %v528, %v532
        %v539 = vunpack.c.l.b16 %v523
        %v540 = vunpack.c.l.b16 %v524
        %v541 = vunpack.c.l.b16 %v525
        %v542 = vunpack.c.l.b16 %v526
        %v543 = vpack.c.b16 %v540, %v539
        %v544 = vpack.c.b16 %v542, %v541
        %547 = vmatprep.subr.bf16.mxu0 0
        %548 = vmatpush1.bf16.msra.mxu0 %v543
        %549 = vmatprep.subr.bf16.mxu0 0
        %550 = vmatpush1.bf16.msra.mxu0 %v544
        %551 = vmatprep.subr.bf16.mxu0 0
        %552 = vmatpush1.bf16.msra.mxu0 0
        %553 = vmatprep.subr.bf16.mxu0 0
        %554 = vmatpush1.bf16.msra.mxu0 0
        %555 = vmatprep.subr.bf16.mxu0 0
        %556 = vmatpush1.bf16.msra.mxu0 0
        %557 = vmatprep.subr.bf16.mxu0 0
        %558 = vmatpush1.bf16.msra.mxu0 0
        %559 = vmatprep.subr.bf16.mxu0 0
        %560 = vmatpush1.bf16.msra.mxu0 0
        %561 = vmatprep.subr.bf16.mxu0 0
        %562 = vmatpush1.bf16.msra.mxu0 0
        %563 = vmatprep.subr.bf16.mxu0 0
        %564 = vmatpush1.bf16.msra.mxu0 0
        %565 = vmatprep.subr.bf16.mxu0 0
        %566 = vmatpush1.bf16.msra.mxu0 0
        %567 = vmatprep.subr.bf16.mxu0 0
        %568 = vmatpush1.bf16.msra.mxu0 0
        %569 = vmatprep.subr.bf16.mxu0 0
        %570 = vmatpush1.bf16.msra.mxu0 0
        %571 = vmatprep.subr.bf16.mxu0 0
        %572 = vmatpush1.bf16.msra.mxu0 0
        %573 = vmatprep.subr.bf16.mxu0 0
        %574 = vmatpush1.bf16.msra.mxu0 0
        %575 = vmatprep.subr.bf16.mxu0 0
        %576 = vmatpush1.bf16.msra.mxu0 0
        %577 = vmatprep.subr.bf16.mxu0 0
        %578 = vmatpush1.bf16.msra.mxu0 0
        %579 = vmatprep.mubr.bf16.mxu0 0
        %580 = vmatmul.mubr.bf16.gmra.mrb[0].mxu0 %v480
        %v581 = vpop.f32.mrb[0].mxu0
        %v582 = vadd.f32 %v533, %v581
        %v583 = vpop.f32.mrb[0].mxu0
        %v584 = vpop.f32.mrb[0].mxu0
        %v585 = vpop.f32.mrb[0].mxu0
        %586 = vdwg.mxu0
        %s587 = scalar_lea.vmem [#allocation9], 32
        %v588 = vld [vmem:[%s587] sm:$0xf]
        %v589 = vld [vmem:[%s587 + $0x4] sm:$0xf]
        %v590 = vld [vmem:[%s587 + $0x8] sm:$0xf]
        %v591 = vld [vmem:[%s587 + $0xc] sm:$0xf]
        %s592 = scalar_lea.vmem [#allocation11], 2
        %v593 = vld [vmem:[%s592] sm:$0x1]
        %v595 = vlaneseq
        %v596 = vshrl.u32 %v595, 7
        %v597 = vsub.s32 0, %v596
        %v598 = vrot.slane %v593, %v597
        %v604 = vunpack.c.l.b16 %v588
        %v605 = vunpack.c.l.b16 %v589
        %v606 = vunpack.c.l.b16 %v590
        %v607 = vunpack.c.l.b16 %v591
        %v608 = vpack.c.b16 %v605, %v604
        %v609 = vpack.c.b16 %v607, %v606
        %v613 = vsel %vm478, %v454, 0
        %615 = vmatprep.subr.bf16.mxu0 0
        %616 = vmatpush1.bf16.msra.mxu0 %v608
        %617 = vmatprep.subr.bf16.mxu0 0
        %618 = vmatpush1.bf16.msra.mxu0 %v609
        %619 = vmatprep.subr.bf16.mxu0 0
        %620 = vmatpush1.bf16.msra.mxu0 0
        %621 = vmatprep.subr.bf16.mxu0 0
        %622 = vmatpush1.bf16.msra.mxu0 0
        %623 = vmatprep.subr.bf16.mxu0 0
        %624 = vmatpush1.bf16.msra.mxu0 0
        %625 = vmatprep.subr.bf16.mxu0 0
        %626 = vmatpush1.bf16.msra.mxu0 0
        %627 = vmatprep.subr.bf16.mxu0 0
        %628 = vmatpush1.bf16.msra.mxu0 0
        %629 = vmatprep.subr.bf16.mxu0 0
        %630 = vmatpush1.bf16.msra.mxu0 0
        %631 = vmatprep.subr.bf16.mxu0 0
        %632 = vmatpush1.bf16.msra.mxu0 0
        %633 = vmatprep.subr.bf16.mxu0 0
        %634 = vmatpush1.bf16.msra.mxu0 0
        %635 = vmatprep.subr.bf16.mxu0 0
        %636 = vmatpush1.bf16.msra.mxu0 0
        %637 = vmatprep.subr.bf16.mxu0 0
        %638 = vmatpush1.bf16.msra.mxu0 0
        %639 = vmatprep.subr.bf16.mxu0 0
        %640 = vmatpush1.bf16.msra.mxu0 0
        %641 = vmatprep.subr.bf16.mxu0 0
        %642 = vmatpush1.bf16.msra.mxu0 0
        %643 = vmatprep.subr.bf16.mxu0 0
        %644 = vmatpush1.bf16.msra.mxu0 0
        %645 = vmatprep.subr.bf16.mxu0 0
        %646 = vmatpush1.bf16.msra.mxu0 0
        %647 = vmatprep.mubr.bf16.mxu0 0
        %648 = vmatmul.mubr.bf16.gmra.mrb[0].mxu0 %v613
        %v649 = vpop.f32.mrb[0].mxu0
        %v650 = vadd.f32 %v598, %v649
        %v651 = vpop.f32.mrb[0].mxu0
        %v652 = vpop.f32.mrb[0].mxu0
        %v653 = vpop.f32.mrb[0].mxu0
        %654 = vdwg.mxu0
        %v655 = vmul.f32 %v517, 0.35355338
        %v656 = vpack.c.bf16 %v655, %v655
        %v657 = vpack.c.bf16 %v582, %v582
        %v658 = vpack.c.bf16 %v650, %v650
        %v659 = vld [vmem:[#allocation8] sm:$0xff]
        %vm660 = vcmask 64512
        %v662 = vsel %vm660, %v656, 0
        %v665 = vsel %vm660, %v657, 0
        %667 = vmatprep.subr.bf16.mxu0 0
        %668 = vmatpush1.bf16.xpose.msra.mxu0 %v665
        %669 = vmatprep.subr.bf16.mxu0 0
        %670 = vmatpush1.bf16.xpose.msra.mxu0 0
        %671 = vmatprep.subr.bf16.mxu0 0
        %672 = vmatpush1.bf16.xpose.msra.mxu0 0
        %673 = vmatprep.subr.bf16.mxu0 0
        %674 = vmatpush1.bf16.xpose.msra.mxu0 0
        %675 = vmatprep.subr.bf16.mxu0 0
        %676 = vmatpush1.bf16.xpose.msra.mxu0 0
        %677 = vmatprep.subr.bf16.mxu0 0
        %678 = vmatpush1.bf16.xpose.msra.mxu0 0
        %679 = vmatprep.subr.bf16.mxu0 0
        %680 = vmatpush1.bf16.xpose.msra.mxu0 0
        %681 = vmatprep.subr.bf16.mxu0 0
        %682 = vmatpush1.bf16.xpose.msra.mxu0 0
        %683 = vmatprep.subr.bf16.mxu0 0
        %684 = vmatpush1.bf16.xpose.msra.mxu0 0
        %685 = vmatprep.subr.bf16.mxu0 0
        %686 = vmatpush1.bf16.xpose.msra.mxu0 0
        %687 = vmatprep.subr.bf16.mxu0 0
        %688 = vmatpush1.bf16.xpose.msra.mxu0 0
        %689 = vmatprep.subr.bf16.mxu0 0
        %690 = vmatpush1.bf16.xpose.msra.mxu0 0
        %691 = vmatprep.subr.bf16.mxu0 0
        %692 = vmatpush1.bf16.xpose.msra.mxu0 0
        %693 = vmatprep.subr.bf16.mxu0 0
        %694 = vmatpush1.bf16.xpose.msra.mxu0 0
        %695 = vmatprep.subr.bf16.mxu0 0
        %696 = vmatpush1.bf16.xpose.msra.mxu0 0
        %697 = vmatprep.subr.bf16.mxu0 0
        %698 = vmatpush1.bf16.xpose.msra.mxu0 0
        %699 = vmatprep.mubr.bf16.mxu0 0
        %700 = vmatmul.mubr.bf16.gmra.mrb[0].mxu0 %v662
        %v701 = vpop.f32.mrb[0].mxu0
        %v702 = vadd.f32 %v659, %v701
        %v703 = vpop.f32.mrb[0].mxu0
        %v704 = vpop.f32.mrb[0].mxu0
        %v705 = vpop.f32.mrb[0].mxu0
        %706 = vdwg.mxu0
        %v707 = vsel %vm660, %v702, -inf
        %708 = vmax.xlane.f32.xlu0 %v707
        %v709 = vpop.xlane.xlu0 %708
        %v710 = vsub.f32 %v702, %v709
        %v711 = vmul.f32 %v710, 1.442695
        %v712 = vpow.pop %v711
        %v713 = vsel %vm660, %v712, 0.0
        %714 = vadd.xlane.f32.xlu0 %v713
        %v715 = vpop.xlane.xlu0 %714
        %v716 = vrcp.pop %v715
        %v717 = vmul.f32 %v712, %v716
        %v718 = vpack.c.bf16 %v717, %v717
        %v720 = vsel %vm660, %v718, 0
        %vm722 = vcmask 1043456
        %v724 = vsel %vm722, %v658, 0
        %726 = vmatprep.subr.bf16.mxu0 0
        %727 = vmatpush1.bf16.msra.mxu0 %v724
        %728 = vmatprep.subr.bf16.mxu0 0
        %729 = vmatpush1.bf16.msra.mxu0 0
        %730 = vmatprep.subr.bf16.mxu0 0
        %731 = vmatpush1.bf16.msra.mxu0 0
        %732 = vmatprep.subr.bf16.mxu0 0
        %733 = vmatpush1.bf16.msra.mxu0 0
        %734 = vmatprep.subr.bf16.mxu0 0
        %735 = vmatpush1.bf16.msra.mxu0 0
        %736 = vmatprep.subr.bf16.mxu0 0
        %737 = vmatpush1.bf16.msra.mxu0 0
        %738 = vmatprep.subr.bf16.mxu0 0
        %739 = vmatpush1.bf16.msra.mxu0 0
        %740 = vmatprep.subr.bf16.mxu0 0
        %741 = vmatpush1.bf16.msra.mxu0 0
        %742 = vmatprep.subr.bf16.mxu0 0
        %743 = vmatpush1.bf16.msra.mxu0 0
        %744 = vmatprep.subr.bf16.mxu0 0
        %745 = vmatpush1.bf16.msra.mxu0 0
        %746 = vmatprep.subr.bf16.mxu0 0
        %747 = vmatpush1.bf16.msra.mxu0 0
        %748 = vmatprep.subr.bf16.mxu0 0
        %749 = vmatpush1.bf16.msra.mxu0 0
        %750 = vmatprep.subr.bf16.mxu0 0
        %751 = vmatpush1.bf16.msra.mxu0 0
        %752 = vmatprep.subr.bf16.mxu0 0
        %753 = vmatpush1.bf16.msra.mxu0 0
        %754 = vmatprep.subr.bf16.mxu0 0
        %755 = vmatpush1.bf16.msra.mxu0 0
        %756 = vmatprep.subr.bf16.mxu0 0
        %757 = vmatpush1.bf16.msra.mxu0 0
        %758 = vmatprep.mubr.bf16.mxu0 0
        %759 = vmatmul.mubr.bf16.gmra.mrb[0].mxu0 %v720
        %v760 = vpop.f32.mrb[0].mxu0
        %v761 = vadd.f32 0.0, %v760
        %v762 = vpop.f32.mrb[0].mxu0
        %v763 = vpop.f32.mrb[0].mxu0
        %v764 = vpop.f32.mrb[0].mxu0
        %765 = vdwg.mxu0
        %766 = vst.msk [vmem:[#allocation2] sm:$0xff] %vm660, %v761
        %768 = vrot.lane.b32.xlu0 %v656, 120
        %v769 = vpop.permute.xlu0 %768
        %771 = vrot.lane.b32.xlu0 %v657, 120
        %v772 = vpop.permute.xlu0 %771
        %v774 = vsel %vm660, %v769, 0
        %v777 = vsel %vm660, %v772, 0
        %779 = vmatprep.subr.bf16.mxu0 0
        %780 = vmatpush1.bf16.xpose.msra.mxu0 %v777
        %781 = vmatprep.subr.bf16.mxu0 0
        %782 = vmatpush1.bf16.xpose.msra.mxu0 0
        %783 = vmatprep.subr.bf16.mxu0 0
        %784 = vmatpush1.bf16.xpose.msra.mxu0 0
        %785 = vmatprep.subr.bf16.mxu0 0
        %786 = vmatpush1.bf16.xpose.msra.mxu0 0
        %787 = vmatprep.subr.bf16.mxu0 0
        %788 = vmatpush1.bf16.xpose.msra.mxu0 0
        %789 = vmatprep.subr.bf16.mxu0 0
        %790 = vmatpush1.bf16.xpose.msra.mxu0 0
        %791 = vmatprep.subr.bf16.mxu0 0
        %792 = vmatpush1.bf16.xpose.msra.mxu0 0
        %793 = vmatprep.subr.bf16.mxu0 0
        %794 = vmatpush1.bf16.xpose.msra.mxu0 0
        %795 = vmatprep.subr.bf16.mxu0 0
        %796 = vmatpush1.bf16.xpose.msra.mxu0 0
        %797 = vmatprep.subr.bf16.mxu0 0
        %798 = vmatpush1.bf16.xpose.msra.mxu0 0
        %799 = vmatprep.subr.bf16.mxu0 0
        %800 = vmatpush1.bf16.xpose.msra.mxu0 0
        %801 = vmatprep.subr.bf16.mxu0 0
        %802 = vmatpush1.bf16.xpose.msra.mxu0 0
        %803 = vmatprep.subr.bf16.mxu0 0
        %804 = vmatpush1.bf16.xpose.msra.mxu0 0
        %805 = vmatprep.subr.bf16.mxu0 0
        %806 = vmatpush1.bf16.xpose.msra.mxu0 0
        %807 = vmatprep.subr.bf16.mxu0 0
        %808 = vmatpush1.bf16.xpose.msra.mxu0 0
        %809 = vmatprep.subr.bf16.mxu0 0
        %810 = vmatpush1.bf16.xpose.msra.mxu0 0
        %811 = vmatprep.mubr.bf16.mxu0 0
        %812 = vmatmul.mubr.bf16.gmra.mrb[0].mxu0 %v774
        %v813 = vpop.f32.mrb[0].mxu0
        %v814 = vadd.f32 %v659, %v813
        %v815 = vpop.f32.mrb[0].mxu0
        %v816 = vpop.f32.mrb[0].mxu0
        %v817 = vpop.f32.mrb[0].mxu0
        %818 = vdwg.mxu0
        %v819 = vsel %vm660, %v814, -inf
        %820 = vmax.xlane.f32.xlu0 %v819
        %v821 = vpop.xlane.xlu0 %820
        %v822 = vsub.f32 %v814, %v821
        %v823 = vmul.f32 %v822, 1.442695
        %v824 = vpow.pop %v823
        %v825 = vsel %vm660, %v824, 0.0
        %826 = vadd.xlane.f32.xlu0 %v825
        %v827 = vpop.xlane.xlu0 %826
        %v828 = vrcp.pop %v827
        %v829 = vmul.f32 %v824, %v828
        %v830 = vpack.c.bf16 %v829, %v829
        %832 = vrot.lane.b32.xlu0 %v658, 120
        %v833 = vpop.permute.xlu0 %832
        %v835 = vsel %vm660, %v830, 0
        %v838 = vsel %vm722, %v833, 0
        %840 = vmatprep.subr.bf16.mxu0 0
        %841 = vmatpush1.bf16.msra.mxu0 %v838
        %842 = vmatprep.subr.bf16.mxu0 0
        %843 = vmatpush1.bf16.msra.mxu0 0
        %844 = vmatprep.subr.bf16.mxu0 0
        %845 = vmatpush1.bf16.msra.mxu0 0
        %846 = vmatprep.subr.bf16.mxu0 0
        %847 = vmatpush1.bf16.msra.mxu0 0
        %848 = vmatprep.subr.bf16.mxu0 0
        %849 = vmatpush1.bf16.msra.mxu0 0
        %850 = vmatprep.subr.bf16.mxu0 0
        %851 = vmatpush1.bf16.msra.mxu0 0
        %852 = vmatprep.subr.bf16.mxu0 0
        %853 = vmatpush1.bf16.msra.mxu0 0
        %854 = vmatprep.subr.bf16.mxu0 0
        %855 = vmatpush1.bf16.msra.mxu0 0
        %856 = vmatprep.subr.bf16.mxu0 0
        %857 = vmatpush1.bf16.msra.mxu0 0
        %858 = vmatprep.subr.bf16.mxu0 0
        %859 = vmatpush1.bf16.msra.mxu0 0
        %860 = vmatprep.subr.bf16.mxu0 0
        %861 = vmatpush1.bf16.msra.mxu0 0
        %862 = vmatprep.subr.bf16.mxu0 0
        %863 = vmatpush1.bf16.msra.mxu0 0
        %864 = vmatprep.subr.bf16.mxu0 0
        %865 = vmatpush1.bf16.msra.mxu0 0
        %866 = vmatprep.subr.bf16.mxu0 0
        %867 = vmatpush1.bf16.msra.mxu0 0
        %868 = vmatprep.subr.bf16.mxu0 0
        %869 = vmatpush1.bf16.msra.mxu0 0
        %870 = vmatprep.subr.bf16.mxu0 0
        %871 = vmatpush1.bf16.msra.mxu0 0
        %872 = vmatprep.mubr.bf16.mxu0 0
        %873 = vmatmul.mubr.bf16.gmra.mrb[0].mxu0 %v835
        %v874 = vpop.f32.mrb[0].mxu0
        %v875 = vadd.f32 0.0, %v874
        %v876 = vpop.f32.mrb[0].mxu0
        %v877 = vpop.f32.mrb[0].mxu0
        %v878 = vpop.f32.mrb[0].mxu0
        %879 = vdwg.mxu0
        %881 = vrot.lane.b32.xlu0 %v875, 8
        %v882 = vpop.permute.xlu0 %881
        %vm884 = vcmask 130112
        %885 = vst.msk [vmem:[#allocation2] sm:$0xff] %vm884, %v882
        %886 = vrot.lane.b32.xlu0 %v656, 112
        %v887 = vpop.permute.xlu0 %886
        %888 = vrot.lane.b32.xlu0 %v657, 112
        %v889 = vpop.permute.xlu0 %888
        %v891 = vsel %vm660, %v887, 0
        %v894 = vsel %vm660, %v889, 0
        %896 = vmatprep.subr.bf16.mxu0 0
        %897 = vmatpush1.bf16.xpose.msra.mxu0 %v894
        %898 = vmatprep.subr.bf16.mxu0 0
        %899 = vmatpush1.bf16.xpose.msra.mxu0 0
        %900 = vmatprep.subr.bf16.mxu0 0
        %901 = vmatpush1.bf16.xpose.msra.mxu0 0
        %902 = vmatprep.subr.bf16.mxu0 0
        %903 = vmatpush1.bf16.xpose.msra.mxu0 0
        %904 = vmatprep.subr.bf16.mxu0 0
        %905 = vmatpush1.bf16.xpose.msra.mxu0 0
        %906 = vmatprep.subr.bf16.mxu0 0
        %907 = vmatpush1.bf16.xpose.msra.mxu0 0
        %908 = vmatprep.subr.bf16.mxu0 0
        %909 = vmatpush1.bf16.xpose.msra.mxu0 0
        %910 = vmatprep.subr.bf16.mxu0 0
        %911 = vmatpush1.bf16.xpose.msra.mxu0 0
        %912 = vmatprep.subr.bf16.mxu0 0
        %913 = vmatpush1.bf16.xpose.msra.mxu0 0
        %914 = vmatprep.subr.bf16.mxu0 0
        %915 = vmatpush1.bf16.xpose.msra.mxu0 0
        %916 = vmatprep.subr.bf16.mxu0 0
        %917 = vmatpush1.bf16.xpose.msra.mxu0 0
        %918 = vmatprep.subr.bf16.mxu0 0
        %919 = vmatpush1.bf16.xpose.msra.mxu0 0
        %920 = vmatprep.subr.bf16.mxu0 0
        %921 = vmatpush1.bf16.xpose.msra.mxu0 0
        %922 = vmatprep.subr.bf16.mxu0 0
        %923 = vmatpush1.bf16.xpose.msra.mxu0 0
        %924 = vmatprep.subr.bf16.mxu0 0
        %925 = vmatpush1.bf16.xpose.msra.mxu0 0
        %926 = vmatprep.subr.bf16.mxu0 0
        %927 = vmatpush1.bf16.xpose.msra.mxu0 0
        %928 = vmatprep.mubr.bf16.mxu0 0
        %929 = vmatmul.mubr.bf16.gmra.mrb[0].mxu0 %v891
        %v930 = vpop.f32.mrb[0].mxu0
        %v931 = vadd.f32 %v659, %v930
        %v932 = vpop.f32.mrb[0].mxu0
        %v933 = vpop.f32.mrb[0].mxu0
        %v934 = vpop.f32.mrb[0].mxu0
        %935 = vdwg.mxu0
        %v936 = vsel %vm660, %v931, -inf
        %937 = vmax.xlane.f32.xlu0 %v936
        %v938 = vpop.xlane.xlu0 %937
        %v939 = vsub.f32 %v931, %v938
        %v940 = vmul.f32 %v939, 1.442695
        %v941 = vpow.pop %v940
        %v942 = vsel %vm660, %v941, 0.0
        %943 = vadd.xlane.f32.xlu0 %v942
        %v944 = vpop.xlane.xlu0 %943
        %v945 = vrcp.pop %v944
        %v946 = vmul.f32 %v941, %v945
        %v947 = vpack.c.bf16 %v946, %v946
        %948 = vrot.lane.b32.xlu0 %v658, 112
        %v949 = vpop.permute.xlu0 %948
        %v951 = vsel %vm660, %v947, 0
        %v954 = vsel %vm722, %v949, 0
        %956 = vmatprep.subr.bf16.mxu0 0
        %957 = vmatpush1.bf16.msra.mxu0 %v954
        %958 = vmatprep.subr.bf16.mxu0 0
        %959 = vmatpush1.bf16.msra.mxu0 0
        %960 = vmatprep.subr.bf16.mxu0 0
        %961 = vmatpush1.bf16.msra.mxu0 0
        %962 = vmatprep.subr.bf16.mxu0 0
        %963 = vmatpush1.bf16.msra.mxu0 0
        %964 = vmatprep.subr.bf16.mxu0 0
        %965 = vmatpush1.bf16.msra.mxu0 0
        %966 = vmatprep.subr.bf16.mxu0 0
        %967 = vmatpush1.bf16.msra.mxu0 0
        %968 = vmatprep.subr.bf16.mxu0 0
        %969 = vmatpush1.bf16.msra.mxu0 0
        %970 = vmatprep.subr.bf16.mxu0 0
        %971 = vmatpush1.bf16.msra.mxu0 0
        %972 = vmatprep.subr.bf16.mxu0 0
        %973 = vmatpush1.bf16.msra.mxu0 0
        %974 = vmatprep.subr.bf16.mxu0 0
        %975 = vmatpush1.bf16.msra.mxu0 0
        %976 = vmatprep.subr.bf16.mxu0 0
        %977 = vmatpush1.bf16.msra.mxu0 0
        %978 = vmatprep.subr.bf16.mxu0 0
        %979 = vmatpush1.bf16.msra.mxu0 0
        %980 = vmatprep.subr.bf16.mxu0 0
        %981 = vmatpush1.bf16.msra.mxu0 0
        %982 = vmatprep.subr.bf16.mxu0 0
        %983 = vmatpush1.bf16.msra.mxu0 0
        %984 = vmatprep.subr.bf16.mxu0 0
        %985 = vmatpush1.bf16.msra.mxu0 0
        %986 = vmatprep.subr.bf16.mxu0 0
        %987 = vmatpush1.bf16.msra.mxu0 0
        %988 = vmatprep.mubr.bf16.mxu0 0
        %989 = vmatmul.mubr.bf16.gmra.mrb[0].mxu0 %v951
        %v990 = vpop.f32.mrb[0].mxu0
        %v991 = vadd.f32 0.0, %v990
        %v992 = vpop.f32.mrb[0].mxu0
        %v993 = vpop.f32.mrb[0].mxu0
        %v994 = vpop.f32.mrb[0].mxu0
        %995 = vdwg.mxu0
        %997 = vrot.lane.b32.xlu0 %v991, 16
        %v998 = vpop.permute.xlu0 %997
        %vm1000 = vcmask 195712
        %1001 = vst.msk [vmem:[#allocation2] sm:$0xff] %vm1000, %v998
        %1002 = vrot.lane.b32.xlu0 %v656, 104
        %v1003 = vpop.permute.xlu0 %1002
        %1004 = vrot.lane.b32.xlu0 %v657, 104
        %v1005 = vpop.permute.xlu0 %1004
        %v1007 = vsel %vm660, %v1003, 0
        %v1010 = vsel %vm660, %v1005, 0
        %1012 = vmatprep.subr.bf16.mxu0 0
        %1013 = vmatpush1.bf16.xpose.msra.mxu0 %v1010
        %1014 = vmatprep.subr.bf16.mxu0 0
        %1015 = vmatpush1.bf16.xpose.msra.mxu0 0
        %1016 = vmatprep.subr.bf16.mxu0 0
        %1017 = vmatpush1.bf16.xpose.msra.mxu0 0
        %1018 = vmatprep.subr.bf16.mxu0 0
        %1019 = vmatpush1.bf16.xpose.msra.mxu0 0
        %1020 = vmatprep.subr.bf16.mxu0 0
        %1021 = vmatpush1.bf16.xpose.msra.mxu0 0
        %1022 = vmatprep.subr.bf16.mxu0 0
        %1023 = vmatpush1.bf16.xpose.msra.mxu0 0
        %1024 = vmatprep.subr.bf16.mxu0 0
        %1025 = vmatpush1.bf16.xpose.msra.mxu0 0
        %1026 = vmatprep.subr.bf16.mxu0 0
        %1027 = vmatpush1.bf16.xpose.msra.mxu0 0
        %1028 = vmatprep.subr.bf16.mxu0 0
        %1029 = vmatpush1.bf16.xpose.msra.mxu0 0
        %1030 = vmatprep.subr.bf16.mxu0 0
        %1031 = vmatpush1.bf16.xpose.msra.mxu0 0
        %1032 = vmatprep.subr.bf16.mxu0 0
        %1033 = vmatpush1.bf16.xpose.msra.mxu0 0
        %1034 = vmatprep.subr.bf16.mxu0 0
        %1035 = vmatpush1.bf16.xpose.msra.mxu0 0
        %1036 = vmatprep.subr.bf16.mxu0 0
        %1037 = vmatpush1.bf16.xpose.msra.mxu0 0
        %1038 = vmatprep.subr.bf16.mxu0 0
        %1039 = vmatpush1.bf16.xpose.msra.mxu0 0
        %1040 = vmatprep.subr.bf16.mxu0 0
        %1041 = vmatpush1.bf16.xpose.msra.mxu0 0
        %1042 = vmatprep.subr.bf16.mxu0 0
        %1043 = vmatpush1.bf16.xpose.msra.mxu0 0
        %1044 = vmatprep.mubr.bf16.mxu0 0
        %1045 = vmatmul.mubr.bf16.gmra.mrb[0].mxu0 %v1007
        %v1046 = vpop.f32.mrb[0].mxu0
        %v1047 = vadd.f32 %v659, %v1046
        %v1048 = vpop.f32.mrb[0].mxu0
        %v1049 = vpop.f32.mrb[0].mxu0
        %v1050 = vpop.f32.mrb[0].mxu0
        %1051 = vdwg.mxu0
        %v1052 = vsel %vm660, %v1047, -inf
        %1053 = vmax.xlane.f32.xlu0 %v1052
        %v1054 = vpop.xlane.xlu0 %1053
        %v1055 = vsub.f32 %v1047, %v1054
        %v1056 = vmul.f32 %v1055, 1.442695
        %v1057 = vpow.pop %v1056
        %v1058 = vsel %vm660, %v1057, 0.0
        %1059 = vadd.xlane.f32.xlu0 %v1058
        %v1060 = vpop.xlane.xlu0 %1059
        %v1061 = vrcp.pop %v1060
        %v1062 = vmul.f32 %v1057, %v1061
        %v1063 = vpack.c.bf16 %v1062, %v1062
        %1064 = vrot.lane.b32.xlu0 %v658, 104
        %v1065 = vpop.permute.xlu0 %1064
        %v1067 = vsel %vm660, %v1063, 0
        %v1070 = vsel %vm722, %v1065, 0
        %1072 = vmatprep.subr.bf16.mxu0 0
        %1073 = vmatpush1.bf16.msra.mxu0 %v1070
        %1074 = vmatprep.subr.bf16.mxu0 0
        %1075 = vmatpush1.bf16.msra.mxu0 0
        %1076 = vmatprep.subr.bf16.mxu0 0
        %1077 = vmatpush1.bf16.msra.mxu0 0
        %1078 = vmatprep.subr.bf16.mxu0 0
        %1079 = vmatpush1.bf16.msra.mxu0 0
        %1080 = vmatprep.subr.bf16.mxu0 0
        %1081 = vmatpush1.bf16.msra.mxu0 0
        %1082 = vmatprep.subr.bf16.mxu0 0
        %1083 = vmatpush1.bf16.msra.mxu0 0
        %1084 = vmatprep.subr.bf16.mxu0 0
        %1085 = vmatpush1.bf16.msra.mxu0 0
        %1086 = vmatprep.subr.bf16.mxu0 0
        %1087 = vmatpush1.bf16.msra.mxu0 0
        %1088 = vmatprep.subr.bf16.mxu0 0
        %1089 = vmatpush1.bf16.msra.mxu0 0
        %1090 = vmatprep.subr.bf16.mxu0 0
        %1091 = vmatpush1.bf16.msra.mxu0 0
        %1092 = vmatprep.subr.bf16.mxu0 0
        %1093 = vmatpush1.bf16.msra.mxu0 0
        %1094 = vmatprep.subr.bf16.mxu0 0
        %1095 = vmatpush1.bf16.msra.mxu0 0
        %1096 = vmatprep.subr.bf16.mxu0 0
        %1097 = vmatpush1.bf16.msra.mxu0 0
        %1098 = vmatprep.subr.bf16.mxu0 0
        %1099 = vmatpush1.bf16.msra.mxu0 0
        %1100 = vmatprep.subr.bf16.mxu0 0
        %1101 = vmatpush1.bf16.msra.mxu0 0
        %1102 = vmatprep.subr.bf16.mxu0 0
        %1103 = vmatpush1.bf16.msra.mxu0 0
        %1104 = vmatprep.mubr.bf16.mxu0 0
        %1105 = vmatmul.mubr.bf16.gmra.mrb[0].mxu0 %v1067
        %v1106 = vpop.f32.mrb[0].mxu0
        %v1107 = vadd.f32 0.0, %v1106
        %v1108 = vpop.f32.mrb[0].mxu0
        %v1109 = vpop.f32.mrb[0].mxu0
        %v1110 = vpop.f32.mrb[0].mxu0
        %1111 = vdwg.mxu0
        %1113 = vrot.lane.b32.xlu0 %v1107, 24
        %v1114 = vpop.permute.xlu0 %1113
        %vm1116 = vcmask 261312
        %1117 = vst.msk [vmem:[#allocation2] sm:$0xff] %vm1116, %v1114
        %v1118 = vld [vmem:[#allocation2] sm:$0xff]
        %v1119 = vpack.c.bf16 %v1118, %v1118
        %v1120 = vld [vmem:[%s5] sm:$0xf]
        %v1121 = vld [vmem:[%s5 + $0x4] sm:$0xf]
        %v1122 = vld [vmem:[%s5 + $0x8] sm:$0xf]
        %v1123 = vld [vmem:[%s5 + $0xc] sm:$0xf]
        %v1124 = vld [vmem:[%s6] sm:$0x1]
        %v1126 = vlaneseq
        %v1127 = vshrl.u32 %v1126, 7
        %v1128 = vsub.s32 0, %v1127
        %v1129 = vrot.slane %v1124, %v1128
        %v1135 = vunpack.c.l.b16 %v1120
        %v1136 = vunpack.c.l.b16 %v1121
        %v1137 = vunpack.c.l.b16 %v1122
        %v1138 = vunpack.c.l.b16 %v1123
        %v1139 = vpack.c.b16 %v1136, %v1135
        %v1140 = vpack.c.b16 %v1138, %v1137
        %v1144 = vsel %vm478, %v1119, 0
        %1146 = vmatprep.subr.bf16.mxu0 0
        %1147 = vmatpush1.bf16.msra.mxu0 %v1139
        %1148 = vmatprep.subr.bf16.mxu0 0
        %1149 = vmatpush1.bf16.msra.mxu0 %v1140
        %1150 = vmatprep.subr.bf16.mxu0 0
        %1151 = vmatpush1.bf16.msra.mxu0 0
        %1152 = vmatprep.subr.bf16.mxu0 0
        %1153 = vmatpush1.bf16.msra.mxu0 0
        %1154 = vmatprep.subr.bf16.mxu0 0
        %1155 = vmatpush1.bf16.msra.mxu0 0
        %1156 = vmatprep.subr.bf16.mxu0 0
        %1157 = vmatpush1.bf16.msra.mxu0 0
        %1158 = vmatprep.subr.bf16.mxu0 0
        %1159 = vmatpush1.bf16.msra.mxu0 0
        %1160 = vmatprep.subr.bf16.mxu0 0
        %1161 = vmatpush1.bf16.msra.mxu0 0
        %1162 = vmatprep.subr.bf16.mxu0 0
        %1163 = vmatpush1.bf16.msra.mxu0 0
        %1164 = vmatprep.subr.bf16.mxu0 0
        %1165 = vmatpush1.bf16.msra.mxu0 0
        %1166 = vmatprep.subr.bf16.mxu0 0
        %1167 = vmatpush1.bf16.msra.mxu0 0
        %1168 = vmatprep.subr.bf16.mxu0 0
        %1169 = vmatpush1.bf16.msra.mxu0 0
        %1170 = vmatprep.subr.bf16.mxu0 0
        %1171 = vmatpush1.bf16.msra.mxu0 0
        %1172 = vmatprep.subr.bf16.mxu0 0
        %1173 = vmatpush1.bf16.msra.mxu0 0
        %1174 = vmatprep.subr.bf16.mxu0 0
        %1175 = vmatpush1.bf16.msra.mxu0 0
        %1176 = vmatprep.subr.bf16.mxu0 0
        %1177 = vmatpush1.bf16.msra.mxu0 0
        %1178 = vmatprep.mubr.bf16.mxu0 0
        %1179 = vmatmul.mubr.bf16.gmra.mrb[0].mxu0 %v1144
        %v1180 = vpop.f32.mrb[0].mxu0
        %v1181 = vadd.f32 %v1129, %v1180
        %v1182 = vpop.f32.mrb[0].mxu0
        %v1183 = vpop.f32.mrb[0].mxu0
        %v1184 = vpop.f32.mrb[0].mxu0
        %1185 = vdwg.mxu0
        %v1186 = vld [vmem:[%s398] sm:$0xff]
        %v1187 = vadd.f32 %v1186, %v1181
        %v1188 = vsel %vm478, %v1187, 0.0
        %1189 = vadd.xlane.f32.xlu0 %v1188
        %v1190 = vpop.xlane.xlu0 %1189
        %v1191 = vrcp.pop 32.0
        %v1192 = vmul.f32 %v1190, %v1191
        %v1193 = vsub.f32 %v1187, %v1192
        %v1194 = vmul.f32 %v1193, %v1193
        %v1195 = vsel %vm478, %v1194, 0.0
        %1196 = vadd.xlane.f32.xlu0 %v1195
        %v1197 = vpop.xlane.xlu0 %1196
        %v1198 = vmul.f32 %v1197, %v1191
        %v1199 = vadd.f32 %v1198, 1e-05
        %v1200 = vrsqrt.pop %v1199
        %v1201 = vmul.f32 %v1193, %v1200
        %v1202 = vld [vmem:[%s7] sm:$0x1]
        %v1204 = vlaneseq
        %v1205 = vshrl.u32 %v1204, 7
        %v1206 = vsub.s32 0, %v1205
        %v1207 = vrot.slane %v1202, %v1206
        %v1209 = vmul.f32 %v1201, %v1207
        %v1210 = vld [vmem:[%s8] sm:$0x1]
        %v1212 = vlaneseq
        %v1213 = vshrl.u32 %v1212, 7
        %v1214 = vsub.s32 0, %v1213
        %v1215 = vrot.slane %v1210, %v1214
        %v1217 = vadd.f32 %v1209, %v1215
        %1218 = vst.msk [vmem:[%s449] sm:$0xff] %vm478, %v1217
        %s1219 = sand.u32 %s258, 1
        %s1220 = scalar_lea.sflag [#allocation5], %s1219
        %s1221 = sand.u32 %s258, 1
        %s1222 = smul.addr %s1221, 8
        %s1223 = scalar_lea.vmem [#allocation12], %s1222
        // Predicated region
        $region77: #{tpu_custom_call.1} parent=55 // pred_check
          %p1224 = pneg %p268
        $region78: #{tpu_custom_call.1} parent=55 // pred_check_branch
          %1226 = sbr.rel (%p1224) target = $region80
        $region79: #{tpu_custom_call.1} parent=55 // pred_region
          %s1228 = ssub.s32 128, 128
          %1229 = vsyncadd %s1220, %s1228
          %s1230 = sadd.s32 %s35, %s34
          %s1231 = smul.addr %s1230, 128
          %s1232 = scalar_lea.hbm %s9, %s1231
          %s1234 = sshll.u32 %s1223, 4
          %s1235 = int_to_ptr.vmem [resolvable:$true] %s1234
          %1237 = dma.vmem_to_hbm [thread:$0]  %s1235, 128, %s1232, %s1220
        $region80: #{tpu_custom_call.1} parent=55 // pred_fallthru
          _
      $region56: #{tpu_custom_call.1} parent=5 // pred_fallthru
        _
      %p1238 = scmp.le.s32.totalorder 2, %s25
      // Predicated region
      $region81: #{tpu_custom_call.1} parent=5 // pred_check
        %p1239 = pneg %p1238
      $region82: #{tpu_custom_call.1} parent=5 // pred_check_branch
        %1241 = sbr.rel (%p1239) target = $region84
      $region83: #{tpu_custom_call.1} parent=5 // pred_region
        %s1242 = ssub.s32 %s25, 2
        // Predicated region
        $region85: #{tpu_custom_call.1} parent=83 // pred_check
          %p1243 = pneg %p274
        $region86: #{tpu_custom_call.1} parent=83 // pred_check_branch
          %1245 = sbr.rel (%p1243) target = $region88
        $region87: #{tpu_custom_call.1} parent=83 // pred_region
          %s1246 = sand.u32 %s259, 1
          %s1247 = scalar_lea.sflag [#allocation5], %s1246
          %s1248 = sand.u32 %s259, 1
          %s1249 = smul.addr %s1248, 8
          %s1250 = scalar_lea.vmem [#allocation12], %s1249
          %1251 = dma.done %s1247, 128
        $region88: #{tpu_custom_call.1} parent=83 // pred_fallthru
          _
      $region84: #{tpu_custom_call.1} parent=5 // pred_fallthru
        _
    $region6: #{tpu_custom_call.1} parent=1 // loop_footer
      %s29 = sadd.s32 1, %s25
    $region7: #{tpu_custom_call.1} parent=1 // loop_footer_branch
      %24 = sbr.rel target = $region3
    $region8: #{tpu_custom_call.1} parent=1 // loop_exit
      _
    %1252 = vsyncpa [#allocation4], 1
    %s1253 = scalar_lea.sflag [#allocation4], 1
    %1254 = vsyncpa %s1253, 1
    %1255 = vsyncpa [#allocation7], 1
    %s1256 = scalar_lea.sflag [#allocation7], 1
    %1257 = vsyncpa %s1256, 1
    %1258 = vsyncpa [#allocation10], 1
    %1259 = vsyncpa [#allocation5], 1
    %s1260 = scalar_lea.sflag [#allocation5], 1
    %1261 = vsyncpa %s1260, 1

</llo_original>
